<compile_context>
chip_gen: v7x
topology: tpu7x:2x2x1
jax: 0.10.0
libtpu: 0.0.40
codegen_flags: <defaults>
</compile_context>

<pallas_src>
import functools

import jax
import jax.numpy as jnp
from jax.experimental import pallas as pl
from jax.experimental.pallas import tpu as pltpu

# ---------------- model config ------------------------------------------------
NUM_LAYERS = 2
IN_DIM = 8
NUM_HIDDEN = 8
NUM_CLASSES = 4
HEADS = (2, 2, 1)          # heads[l] per GATConv layer; heads[-2] feeds the head
NEG_SLOPE = 0.2
N_NODES = 16
RESIDUAL = True            # identity residual for layers >= 1 (shapes match)
# feat_drop / attn_drop = 0.0 -> dropout is a no-op in eval; not emitted.

_VMEM = pl.BlockSpec(memory_space=pltpu.MemorySpace.VMEM)
_SMEM = pl.BlockSpec(memory_space=pltpu.MemorySpace.SMEM)


# ---------------- fused Pallas kernel -----------------------------------------
def _gat_layer(x, adj, mask, w, al_blk, ar_blk, *, num_heads, out_dim,
               neg_slope, residual):
  """One GATConv layer on in-register values.

  x: [M, F_in]   adj/mask: [M, M]   w: [F_in, H*D]   al_blk/ar_blk: [H*D, H]
  returns [M, H*D]
  """
  feat = jnp.dot(x, w, preferred_element_type=jnp.float32)         # [M, H*D]
  # All heads at once on the MXU (al_blk/ar_blk are block-diagonal).
  el = jnp.dot(feat, al_blk, preferred_element_type=jnp.float32)   # [M, H] src
  er = jnp.dot(feat, ar_blk, preferred_element_type=jnp.float32)   # [M, H] dst
  el_t = el.T                                  # [H, M]: one small transpose/layer

  outs = []
  for h in range(num_heads):                   # static unroll, H is tiny
    s = er[:, h:h + 1] + el_t[h:h + 1, :]      # [dst, src]
    s = jnp.maximum(s, neg_slope * s)          # leaky_relu
    s = jnp.where(mask, s, -1e30)              # only existing edges
    m = jnp.max(s, axis=-1, keepdims=True)
    p = jnp.exp(s - m)                         # exactly 0 on non-edges
    denom = jnp.sum(p, axis=-1, keepdims=True)
    alpha = p * pl.reciprocal(denom, approx=True)   # EUP; denom >= 1 (self-loops)
    outs.append(jnp.dot(alpha, feat[:, h * out_dim:(h + 1) * out_dim],
                        preferred_element_type=jnp.float32))        # [M, D]
  rst = outs[0] if num_heads == 1 else jnp.concatenate(outs, axis=-1)
  if residual:                                 # identity residual, full width
    rst = rst + x
  # ELU once over the full [M, H*D] width (safe exp on the negative branch).
  return jnp.where(rst > 0.0, rst, jnp.exp(jnp.minimum(rst, 0.0)) - 1.0)


def _gat_forward_kernel(lamb_ref, x_ref, adj_ref,
                        w0_ref, al0_ref, ar0_ref,
                        w1_ref, al1_ref, ar1_ref,
                        hw_ref, hb_ref,
                        h_ref, logits_ref, *,
                        n_nodes, heads, out_dim, neg_slope, residual,
                        mixup_hidden):
  """Full GAT forward.  x: [2N, F_in] (rows 0..N-1 = inputs, N..2N-1 = target),
  adj: block-diagonal [2N, 2N] edge mask.  Outputs h [N, H*D], logits [N, C]."""
  adj = adj_ref[...]
  mask = adj > 0.0                             # hoisted: shared by layers/heads

  h = x_ref[...].astype(jnp.float32)
  h = _gat_layer(h, adj, mask, w0_ref[...], al0_ref[...], ar0_ref[...],
                 num_heads=heads[0], out_dim=out_dim,
                 neg_slope=neg_slope, residual=False)
  h = _gat_layer(h, adj, mask, w1_ref[...], al1_ref[...], ar1_ref[...],
                 num_heads=heads[1], out_dim=out_dim,
                 neg_slope=neg_slope, residual=residual)

  h_in = h[:n_nodes, :]                        # inputs stream
  if mixup_hidden:
    lam = lamb_ref[0, 0]
    h_in = lam * h_in + (1.0 - lam) * h[n_nodes:, :]
  h_ref[...] = h_in
  logits_ref[...] = (jnp.dot(h_in, hw_ref[...],
                             preferred_element_type=jnp.float32) + hb_ref[...])


# ---------------- wrapper ------------------------------------------------------
def gat_forward(params, adj, inputs, target, lamb, mixup_hidden=False):
  n = inputs.shape[0]
  # Batch both streams along the node axis; block-diagonal adjacency keeps the
  # two graphs independent (per-stream softmax identical to two separate runs).
  x_cat = jnp.concatenate([inputs, target], axis=0)
  z = jnp.zeros_like(adj)
  adj2 = jnp.concatenate(
      [jnp.concatenate([adj, z], axis=1), jnp.concatenate([z, adj], axis=1)],
      axis=0)
  lamb2d = jnp.reshape(jnp.asarray(lamb, jnp.float32), (1, 1))

  p0, p1 = params["gat"]
  kernel = functools.partial(
      _gat_forward_kernel, n_nodes=n, heads=(HEADS[0], HEADS[1]),
      out_dim=NUM_HIDDEN, neg_slope=NEG_SLOPE, residual=RESIDUAL,
      mixup_hidden=mixup_hidden)

  h, logits = pl.pallas_call(
      kernel,
      out_shape=(jax.ShapeDtypeStruct((n, HEADS[1] * NUM_HIDDEN), jnp.float32),
                 jax.ShapeDtypeStruct((n, NUM_CLASSES), jnp.float32)),
      in_specs=[_SMEM] + [_VMEM] * 10,
      out_specs=(_VMEM, _VMEM),
  )(lamb2d, x_cat, adj2,
    p0["w"], p0["al_blk"], p0["ar_blk"],
    p1["w"], p1["al_blk"], p1["ar_blk"],
    params["head_w"], params["head_b"])
  return h, logits


# ---------------- params / inputs ----------------------------------------------
def _block_attn(a):
  """[H, D] attention vector -> [H*D, H] block-diagonal matrix so that
  feat[M, H*D] @ a_blk gives per-head sum(feat_h * a_h, -1) for all heads."""
  h, d = a.shape
  eye = jnp.eye(h, dtype=a.dtype)
  return (a[:, :, None] * eye[:, None, :]).reshape(h * d, h)


def init_params(key):
  params = {"gat": []}
  in_dims = [IN_DIM] + [NUM_HIDDEN * HEADS[l - 1] for l in range(1, NUM_LAYERS)]
  for l in range(NUM_LAYERS):
    key, k1, k2, k3 = jax.random.split(key, 4)
    f_in = in_dims[l]
    al = 0.3 * jax.random.normal(k2, (HEADS[l], NUM_HIDDEN), jnp.float32)
    ar = 0.3 * jax.random.normal(k3, (HEADS[l], NUM_HIDDEN), jnp.float32)
    params["gat"].append({
        "w": 0.3 * jax.random.normal(k1, (f_in, HEADS[l] * NUM_HIDDEN),
                                     jnp.float32),
        "al": al, "ar": ar,                  # raw DGL-style attention vectors
        "al_blk": _block_attn(al),           # kernel-side block matrices
        "ar_blk": _block_attn(ar),
    })
  key, k1, k2 = jax.random.split(key, 3)
  head_in = NUM_HIDDEN * HEADS[-2]
  params["head_w"] = 0.3 * jax.random.normal(k1, (head_in, NUM_CLASSES),
                                             jnp.float32)
  params["head_b"] = 0.1 * jax.random.normal(k2, (1, NUM_CLASSES), jnp.float32)
  return params


def build_adj(n):
  # deterministic ring graph with self-loops; adj[dst, src]
  i = jnp.arange(n)
  adj = jnp.zeros((n, n), jnp.float32)
  adj = adj.at[i, i].set(1.0)
  adj = adj.at[i, (i + 1) % n].set(1.0)
  adj = adj.at[i, (i - 1) % n].set(1.0)
  return adj


# ---------------- pure-JAX reference (correctness check) -----------------------
def _ref_gat_layer(x, adj, w, al, ar, *, num_heads, out_dim, neg_slope,
                   residual):
  feat = x @ w
  mask = adj > 0.0
  outs = []
  for h in range(num_heads):
    fh = feat[:, h * out_dim:(h + 1) * out_dim]
    el = jnp.sum(fh * al[h], axis=-1)
    er = jnp.sum(fh * ar[h], axis=-1)
    s = er[:, None] + el[None, :]
    s = jnp.where(s >= 0.0, s, neg_slope * s)
    s = jnp.where(mask, s, -1e30)
    s = s - jnp.max(s, axis=-1, keepdims=True)
    p = jnp.where(mask, jnp.exp(s), 0.0)
    alpha = p / jnp.sum(p, axis=-1, keepdims=True)
    outs.append(alpha @ fh)
  rst = jnp.concatenate(outs, axis=-1)
  if residual:
    rst = rst + x
  return jnp.where(rst > 0.0, rst, jnp.exp(jnp.minimum(rst, 0.0)) - 1.0)


def reference_forward(params, adj, inputs, target, lamb, mixup_hidden=False):
  def run(x):
    h = x
    for l in range(NUM_LAYERS):
      p = params["gat"][l]
      h = _ref_gat_layer(h, adj, p["w"], p["al"], p["ar"],
                         num_heads=HEADS[l], out_dim=NUM_HIDDEN,
                         neg_slope=NEG_SLOPE, residual=(RESIDUAL and l > 0))
    return h
  h = run(inputs)
  h2 = run(target)
  if mixup_hidden:
    h = lamb * h + (1.0 - lamb) * h2
  logits = h @ params["head_w"] + params["head_b"]
  return h, logits


# ---------------- main ----------------------------------------------------------
if __name__ == "__main__":
  key = jax.random.PRNGKey(0)
  key, kx, kt = jax.random.split(key, 3)
  inputs = jax.random.normal(kx, (N_NODES, IN_DIM), jnp.float32)
  target = jax.random.normal(kt, (N_NODES, IN_DIM), jnp.float32)
  lamb = jnp.float32(0.7)
  params = init_params(key)
  adj = build_adj(N_NODES)

  fwd = jax.jit(functools.partial(gat_forward, mixup_hidden=True))
  h, logits = fwd(params, adj, inputs, target, lamb)
  jax.block_until_ready((h, logits))

  assert h.shape == (N_NODES, NUM_HIDDEN * HEADS[-2])
  assert logits.shape == (N_NODES, NUM_CLASSES)

  h_ref, logits_ref = reference_forward(params, adj, inputs, target, lamb,
                                        mixup_hidden=True)
  assert jnp.allclose(h, h_ref, atol=1e-2, rtol=1e-2)
  assert jnp.allclose(logits, logits_ref, atol=1e-2, rtol=1e-2)
  print("KERNEL_OK")
</pallas_src>

<mosaic_0001>
module attributes {stable_mosaic.version = 11 : i64} {
  func.func @_gat_forward_kernel(%arg0: memref<1x1xf32, #tpu.memory_space<smem>>, %arg1: memref<32x8xf32, #tpu.memory_space<vmem>>, %arg2: memref<32x32xf32, #tpu.memory_space<vmem>>, %arg3: memref<8x16xf32, #tpu.memory_space<vmem>>, %arg4: memref<16x2xf32, #tpu.memory_space<vmem>>, %arg5: memref<16x2xf32, #tpu.memory_space<vmem>>, %arg6: memref<16x16xf32, #tpu.memory_space<vmem>>, %arg7: memref<16x2xf32, #tpu.memory_space<vmem>>, %arg8: memref<16x2xf32, #tpu.memory_space<vmem>>, %arg9: memref<16x4xf32, #tpu.memory_space<vmem>>, %arg10: memref<1x4xf32, #tpu.memory_space<vmem>>, %arg11: memref<16x16xf32, #tpu.memory_space<vmem>>, %arg12: memref<16x4xf32, #tpu.memory_space<vmem>>) attributes {dimension_semantics = [], scalar_prefetch = 0 : i64, scratch_operands = 0 : i64, tpu.core_type = #tpu.core_type<tc>} {
    %c0 = arith.constant 0 : index
    %c0_0 = arith.constant 0 : index
    %0 = vector.load %arg2[%c0, %c0_0] : memref<32x32xf32, #tpu.memory_space<vmem>>, vector<32x32xf32>
    %cst = arith.constant 0.000000e+00 : f32
    %1 = vector.broadcast %cst : f32 to vector<32x32xf32>
    %2 = arith.cmpf ogt, %0, %1 : vector<32x32xf32>
    %c0_1 = arith.constant 0 : index
    %c0_2 = arith.constant 0 : index
    %3 = vector.load %arg1[%c0_1, %c0_2] : memref<32x8xf32, #tpu.memory_space<vmem>>, vector<32x8xf32>
    %c0_3 = arith.constant 0 : index
    %c0_4 = arith.constant 0 : index
    %4 = vector.load %arg3[%c0_3, %c0_4] : memref<8x16xf32, #tpu.memory_space<vmem>>, vector<8x16xf32>
    %c0_5 = arith.constant 0 : index
    %c0_6 = arith.constant 0 : index
    %5 = vector.load %arg4[%c0_5, %c0_6] : memref<16x2xf32, #tpu.memory_space<vmem>>, vector<16x2xf32>
    %c0_7 = arith.constant 0 : index
    %c0_8 = arith.constant 0 : index
    %6 = vector.load %arg5[%c0_7, %c0_8] : memref<16x2xf32, #tpu.memory_space<vmem>>, vector<16x2xf32>
    %cst_9 = arith.constant dense<0.000000e+00> : vector<32x16xf32>
    %7 = tpu.matmul %3, %4, %cst_9 {dimension_numbers = #tpu.dot_dimension_numbers<[1], [0], [0], [1], [0, 0, 1, 1], [], []>} : vector<32x8xf32>, vector<8x16xf32>, vector<32x16xf32> -> vector<32x16xf32>
    %cst_10 = arith.constant dense<0.000000e+00> : vector<32x2xf32>
    %8 = tpu.matmul %7, %5, %cst_10 {dimension_numbers = #tpu.dot_dimension_numbers<[1], [0], [0], [1], [0, 0, 1, 1], [], []>} : vector<32x16xf32>, vector<16x2xf32>, vector<32x2xf32> -> vector<32x2xf32>
    %cst_11 = arith.constant dense<0.000000e+00> : vector<32x2xf32>
    %9 = tpu.matmul %7, %6, %cst_11 {dimension_numbers = #tpu.dot_dimension_numbers<[1], [0], [0], [1], [0, 0, 1, 1], [], []>} : vector<32x16xf32>, vector<16x2xf32>, vector<32x2xf32> -> vector<32x2xf32>
    %10 = tpu.transpose %8, [1, 0] : vector<32x2xf32> -> vector<2x32xf32>
    %11 = vector.extract_strided_slice %9 {offsets = [0, 0], sizes = [32, 1], strides = [1, 1]} : vector<32x2xf32> to vector<32x1xf32>
    %12 = vector.extract_strided_slice %10 {offsets = [0, 0], sizes = [1, 32], strides = [1, 1]} : vector<2x32xf32> to vector<1x32xf32>
    %13 = vector.broadcast %11 : vector<32x1xf32> to vector<32x32xf32>
    %14 = vector.broadcast %12 : vector<1x32xf32> to vector<32x32xf32>
    %15 = arith.addf %13, %14 : vector<32x32xf32>
    %cst_12 = arith.constant 2.000000e-01 : f32
    %16 = vector.broadcast %cst_12 : f32 to vector<32x32xf32>
    %17 = arith.mulf %16, %15 : vector<32x32xf32>
    %18 = arith.maximumf %15, %17 : vector<32x32xf32>
    %cst_13 = arith.constant -1.000000e+30 : f32
    %19 = vector.broadcast %cst_13 : f32 to vector<32x32xf32>
    %20 = arith.select %2, %18, %19 : vector<32x32xi1>, vector<32x32xf32>
    %cst_14 = arith.constant dense<0xFF800000> : vector<32xf32>
    %21 = vector.multi_reduction <maximumf>, %20, %cst_14 [1] : vector<32x32xf32> to vector<32xf32>
    %22 = vector.shape_cast %21 : vector<32xf32> to vector<32x1xf32>
    %23 = vector.broadcast %22 : vector<32x1xf32> to vector<32x32xf32>
    %24 = arith.subf %20, %23 : vector<32x32xf32>
    %25 = math.exp %24 : vector<32x32xf32>
    %cst_15 = arith.constant dense<0.000000e+00> : vector<32xf32>
    %26 = vector.multi_reduction <add>, %25, %cst_15 [1] : vector<32x32xf32> to vector<32xf32>
    %27 = vector.shape_cast %26 : vector<32xf32> to vector<32x1xf32>
    %28 = tpu.reciprocal %27 {approx = true} : vector<32x1xf32> -> vector<32x1xf32>
    %29 = vector.broadcast %28 : vector<32x1xf32> to vector<32x32xf32>
    %30 = arith.mulf %25, %29 : vector<32x32xf32>
    %31 = vector.extract_strided_slice %7 {offsets = [0, 0], sizes = [32, 8], strides = [1, 1]} : vector<32x16xf32> to vector<32x8xf32>
    %cst_16 = arith.constant dense<0.000000e+00> : vector<32x8xf32>
    %32 = tpu.matmul %30, %31, %cst_16 {dimension_numbers = #tpu.dot_dimension_numbers<[1], [0], [0], [1], [0, 0, 1, 1], [], []>} : vector<32x32xf32>, vector<32x8xf32>, vector<32x8xf32> -> vector<32x8xf32>
    %33 = vector.extract_strided_slice %9 {offsets = [0, 1], sizes = [32, 1], strides = [1, 1]} : vector<32x2xf32> to vector<32x1xf32>
    %34 = vector.extract_strided_slice %10 {offsets = [1, 0], sizes = [1, 32], strides = [1, 1]} : vector<2x32xf32> to vector<1x32xf32>
    %35 = vector.broadcast %33 : vector<32x1xf32> to vector<32x32xf32>
    %36 = vector.broadcast %34 : vector<1x32xf32> to vector<32x32xf32>
    %37 = arith.addf %35, %36 : vector<32x32xf32>
    %cst_17 = arith.constant 2.000000e-01 : f32
    %38 = vector.broadcast %cst_17 : f32 to vector<32x32xf32>
    %39 = arith.mulf %38, %37 : vector<32x32xf32>
    %40 = arith.maximumf %37, %39 : vector<32x32xf32>
    %cst_18 = arith.constant -1.000000e+30 : f32
    %41 = vector.broadcast %cst_18 : f32 to vector<32x32xf32>
    %42 = arith.select %2, %40, %41 : vector<32x32xi1>, vector<32x32xf32>
    %cst_19 = arith.constant dense<0xFF800000> : vector<32xf32>
    %43 = vector.multi_reduction <maximumf>, %42, %cst_19 [1] : vector<32x32xf32> to vector<32xf32>
    %44 = vector.shape_cast %43 : vector<32xf32> to vector<32x1xf32>
    %45 = vector.broadcast %44 : vector<32x1xf32> to vector<32x32xf32>
    %46 = arith.subf %42, %45 : vector<32x32xf32>
    %47 = math.exp %46 : vector<32x32xf32>
    %cst_20 = arith.constant dense<0.000000e+00> : vector<32xf32>
    %48 = vector.multi_reduction <add>, %47, %cst_20 [1] : vector<32x32xf32> to vector<32xf32>
    %49 = vector.shape_cast %48 : vector<32xf32> to vector<32x1xf32>
    %50 = tpu.reciprocal %49 {approx = true} : vector<32x1xf32> -> vector<32x1xf32>
    %51 = vector.broadcast %50 : vector<32x1xf32> to vector<32x32xf32>
    %52 = arith.mulf %47, %51 : vector<32x32xf32>
    %53 = vector.extract_strided_slice %7 {offsets = [0, 8], sizes = [32, 8], strides = [1, 1]} : vector<32x16xf32> to vector<32x8xf32>
    %cst_21 = arith.constant dense<0.000000e+00> : vector<32x8xf32>
    %54 = tpu.matmul %52, %53, %cst_21 {dimension_numbers = #tpu.dot_dimension_numbers<[1], [0], [0], [1], [0, 0, 1, 1], [], []>} : vector<32x32xf32>, vector<32x8xf32>, vector<32x8xf32> -> vector<32x8xf32>
    %55 = tpu.concatenate %32, %54 in 1 : vector<32x8xf32>, vector<32x8xf32> -> vector<32x16xf32>
    %cst_22 = arith.constant 0.000000e+00 : f32
    %56 = vector.broadcast %cst_22 : f32 to vector<32x16xf32>
    %57 = arith.cmpf ogt, %55, %56 : vector<32x16xf32>
    %cst_23 = arith.constant 0.000000e+00 : f32
    %58 = vector.broadcast %cst_23 : f32 to vector<32x16xf32>
    %59 = arith.minimumf %55, %58 : vector<32x16xf32>
    %60 = math.exp %59 : vector<32x16xf32>
    %cst_24 = arith.constant 1.000000e+00 : f32
    %61 = vector.broadcast %cst_24 : f32 to vector<32x16xf32>
    %62 = arith.subf %60, %61 : vector<32x16xf32>
    %63 = arith.select %57, %55, %62 : vector<32x16xi1>, vector<32x16xf32>
    %c0_25 = arith.constant 0 : index
    %c0_26 = arith.constant 0 : index
    %64 = vector.load %arg6[%c0_25, %c0_26] : memref<16x16xf32, #tpu.memory_space<vmem>>, vector<16x16xf32>
    %c0_27 = arith.constant 0 : index
    %c0_28 = arith.constant 0 : index
    %65 = vector.load %arg7[%c0_27, %c0_28] : memref<16x2xf32, #tpu.memory_space<vmem>>, vector<16x2xf32>
    %c0_29 = arith.constant 0 : index
    %c0_30 = arith.constant 0 : index
    %66 = vector.load %arg8[%c0_29, %c0_30] : memref<16x2xf32, #tpu.memory_space<vmem>>, vector<16x2xf32>
    %cst_31 = arith.constant dense<0.000000e+00> : vector<32x16xf32>
    %67 = tpu.matmul %63, %64, %cst_31 {dimension_numbers = #tpu.dot_dimension_numbers<[1], [0], [0], [1], [0, 0, 1, 1], [], []>} : vector<32x16xf32>, vector<16x16xf32>, vector<32x16xf32> -> vector<32x16xf32>
    %cst_32 = arith.constant dense<0.000000e+00> : vector<32x2xf32>
    %68 = tpu.matmul %67, %65, %cst_32 {dimension_numbers = #tpu.dot_dimension_numbers<[1], [0], [0], [1], [0, 0, 1, 1], [], []>} : vector<32x16xf32>, vector<16x2xf32>, vector<32x2xf32> -> vector<32x2xf32>
    %cst_33 = arith.constant dense<0.000000e+00> : vector<32x2xf32>
    %69 = tpu.matmul %67, %66, %cst_33 {dimension_numbers = #tpu.dot_dimension_numbers<[1], [0], [0], [1], [0, 0, 1, 1], [], []>} : vector<32x16xf32>, vector<16x2xf32>, vector<32x2xf32> -> vector<32x2xf32>
    %70 = tpu.transpose %68, [1, 0] : vector<32x2xf32> -> vector<2x32xf32>
    %71 = vector.extract_strided_slice %69 {offsets = [0, 0], sizes = [32, 1], strides = [1, 1]} : vector<32x2xf32> to vector<32x1xf32>
    %72 = vector.extract_strided_slice %70 {offsets = [0, 0], sizes = [1, 32], strides = [1, 1]} : vector<2x32xf32> to vector<1x32xf32>
    %73 = vector.broadcast %71 : vector<32x1xf32> to vector<32x32xf32>
    %74 = vector.broadcast %72 : vector<1x32xf32> to vector<32x32xf32>
    %75 = arith.addf %73, %74 : vector<32x32xf32>
    %cst_34 = arith.constant 2.000000e-01 : f32
    %76 = vector.broadcast %cst_34 : f32 to vector<32x32xf32>
    %77 = arith.mulf %76, %75 : vector<32x32xf32>
    %78 = arith.maximumf %75, %77 : vector<32x32xf32>
    %cst_35 = arith.constant -1.000000e+30 : f32
    %79 = vector.broadcast %cst_35 : f32 to vector<32x32xf32>
    %80 = arith.select %2, %78, %79 : vector<32x32xi1>, vector<32x32xf32>
    %cst_36 = arith.constant dense<0xFF800000> : vector<32xf32>
    %81 = vector.multi_reduction <maximumf>, %80, %cst_36 [1] : vector<32x32xf32> to vector<32xf32>
    %82 = vector.shape_cast %81 : vector<32xf32> to vector<32x1xf32>
    %83 = vector.broadcast %82 : vector<32x1xf32> to vector<32x32xf32>
    %84 = arith.subf %80, %83 : vector<32x32xf32>
    %85 = math.exp %84 : vector<32x32xf32>
    %cst_37 = arith.constant dense<0.000000e+00> : vector<32xf32>
    %86 = vector.multi_reduction <add>, %85, %cst_37 [1] : vector<32x32xf32> to vector<32xf32>
    %87 = vector.shape_cast %86 : vector<32xf32> to vector<32x1xf32>
    %88 = tpu.reciprocal %87 {approx = true} : vector<32x1xf32> -> vector<32x1xf32>
    %89 = vector.broadcast %88 : vector<32x1xf32> to vector<32x32xf32>
    %90 = arith.mulf %85, %89 : vector<32x32xf32>
    %91 = vector.extract_strided_slice %67 {offsets = [0, 0], sizes = [32, 8], strides = [1, 1]} : vector<32x16xf32> to vector<32x8xf32>
    %cst_38 = arith.constant dense<0.000000e+00> : vector<32x8xf32>
    %92 = tpu.matmul %90, %91, %cst_38 {dimension_numbers = #tpu.dot_dimension_numbers<[1], [0], [0], [1], [0, 0, 1, 1], [], []>} : vector<32x32xf32>, vector<32x8xf32>, vector<32x8xf32> -> vector<32x8xf32>
    %93 = vector.extract_strided_slice %69 {offsets = [0, 1], sizes = [32, 1], strides = [1, 1]} : vector<32x2xf32> to vector<32x1xf32>
    %94 = vector.extract_strided_slice %70 {offsets = [1, 0], sizes = [1, 32], strides = [1, 1]} : vector<2x32xf32> to vector<1x32xf32>
    %95 = vector.broadcast %93 : vector<32x1xf32> to vector<32x32xf32>
    %96 = vector.broadcast %94 : vector<1x32xf32> to vector<32x32xf32>
    %97 = arith.addf %95, %96 : vector<32x32xf32>
    %cst_39 = arith.constant 2.000000e-01 : f32
    %98 = vector.broadcast %cst_39 : f32 to vector<32x32xf32>
    %99 = arith.mulf %98, %97 : vector<32x32xf32>
    %100 = arith.maximumf %97, %99 : vector<32x32xf32>
    %cst_40 = arith.constant -1.000000e+30 : f32
    %101 = vector.broadcast %cst_40 : f32 to vector<32x32xf32>
    %102 = arith.select %2, %100, %101 : vector<32x32xi1>, vector<32x32xf32>
    %cst_41 = arith.constant dense<0xFF800000> : vector<32xf32>
    %103 = vector.multi_reduction <maximumf>, %102, %cst_41 [1] : vector<32x32xf32> to vector<32xf32>
    %104 = vector.shape_cast %103 : vector<32xf32> to vector<32x1xf32>
    %105 = vector.broadcast %104 : vector<32x1xf32> to vector<32x32xf32>
    %106 = arith.subf %102, %105 : vector<32x32xf32>
    %107 = math.exp %106 : vector<32x32xf32>
    %cst_42 = arith.constant dense<0.000000e+00> : vector<32xf32>
    %108 = vector.multi_reduction <add>, %107, %cst_42 [1] : vector<32x32xf32> to vector<32xf32>
    %109 = vector.shape_cast %108 : vector<32xf32> to vector<32x1xf32>
    %110 = tpu.reciprocal %109 {approx = true} : vector<32x1xf32> -> vector<32x1xf32>
    %111 = vector.broadcast %110 : vector<32x1xf32> to vector<32x32xf32>
    %112 = arith.mulf %107, %111 : vector<32x32xf32>
    %113 = vector.extract_strided_slice %67 {offsets = [0, 8], sizes = [32, 8], strides = [1, 1]} : vector<32x16xf32> to vector<32x8xf32>
    %cst_43 = arith.constant dense<0.000000e+00> : vector<32x8xf32>
    %114 = tpu.matmul %112, %113, %cst_43 {dimension_numbers = #tpu.dot_dimension_numbers<[1], [0], [0], [1], [0, 0, 1, 1], [], []>} : vector<32x32xf32>, vector<32x8xf32>, vector<32x8xf32> -> vector<32x8xf32>
    %115 = tpu.concatenate %92, %114 in 1 : vector<32x8xf32>, vector<32x8xf32> -> vector<32x16xf32>
    %116 = arith.addf %115, %63 : vector<32x16xf32>
    %cst_44 = arith.constant 0.000000e+00 : f32
    %117 = vector.broadcast %cst_44 : f32 to vector<32x16xf32>
    %118 = arith.cmpf ogt, %116, %117 : vector<32x16xf32>
    %cst_45 = arith.constant 0.000000e+00 : f32
    %119 = vector.broadcast %cst_45 : f32 to vector<32x16xf32>
    %120 = arith.minimumf %116, %119 : vector<32x16xf32>
    %121 = math.exp %120 : vector<32x16xf32>
    %cst_46 = arith.constant 1.000000e+00 : f32
    %122 = vector.broadcast %cst_46 : f32 to vector<32x16xf32>
    %123 = arith.subf %121, %122 : vector<32x16xf32>
    %124 = arith.select %118, %116, %123 : vector<32x16xi1>, vector<32x16xf32>
    %125 = vector.extract_strided_slice %124 {offsets = [0, 0], sizes = [16, 16], strides = [1, 1]} : vector<32x16xf32> to vector<16x16xf32>
    %c0_47 = arith.constant 0 : index
    %c0_48 = arith.constant 0 : index
    %126 = memref.load %arg0[%c0_47, %c0_48] : memref<1x1xf32, #tpu.memory_space<smem>>
    %127 = vector.broadcast %126 : f32 to vector<16x16xf32>
    %128 = arith.mulf %127, %125 : vector<16x16xf32>
    %cst_49 = arith.constant 1.000000e+00 : f32
    %129 = arith.subf %cst_49, %126 : f32
    %130 = vector.extract_strided_slice %124 {offsets = [16, 0], sizes = [16, 16], strides = [1, 1]} : vector<32x16xf32> to vector<16x16xf32>
    %131 = vector.broadcast %129 : f32 to vector<16x16xf32>
    %132 = arith.mulf %131, %130 : vector<16x16xf32>
    %133 = arith.addf %128, %132 : vector<16x16xf32>
    %c0_50 = arith.constant 0 : index
    %c0_51 = arith.constant 0 : index
    %134 = vector.load %arg11[%c0_50, %c0_51] : memref<16x16xf32, #tpu.memory_space<vmem>>, vector<16x16xf32>
    tpu.vector_store %arg11[%c0_50, %c0_51], %133 {strides = array<i32>} : memref<16x16xf32, #tpu.memory_space<vmem>>, vector<16x16xf32>,
    %c0_52 = arith.constant 0 : index
    %c0_53 = arith.constant 0 : index
    %135 = vector.load %arg9[%c0_52, %c0_53] : memref<16x4xf32, #tpu.memory_space<vmem>>, vector<16x4xf32>
    %cst_54 = arith.constant dense<0.000000e+00> : vector<16x4xf32>
    %136 = tpu.matmul %133, %135, %cst_54 {dimension_numbers = #tpu.dot_dimension_numbers<[1], [0], [0], [1], [0, 0, 1, 1], [], []>} : vector<16x16xf32>, vector<16x4xf32>, vector<16x4xf32> -> vector<16x4xf32>
    %c0_55 = arith.constant 0 : index
    %c0_56 = arith.constant 0 : index
    %137 = vector.load %arg10[%c0_55, %c0_56] : memref<1x4xf32, #tpu.memory_space<vmem>>, vector<1x4xf32>
    %138 = vector.broadcast %137 : vector<1x4xf32> to vector<16x4xf32>
    %139 = arith.addf %136, %138 : vector<16x4xf32>
    %c0_57 = arith.constant 0 : index
    %c0_58 = arith.constant 0 : index
    %140 = vector.load %arg12[%c0_57, %c0_58] : memref<16x4xf32, #tpu.memory_space<vmem>>, vector<16x4xf32>
    tpu.vector_store %arg12[%c0_57, %c0_58], %139 {strides = array<i32>} : memref<16x4xf32, #tpu.memory_space<vmem>>, vector<16x4xf32>,
    return
  }
}

</mosaic_0001>

<llo_original>
// kernel: gat_forward.1
$region0: #{gat_forward.1}
  #allocation0 [shape = 'u32[]', space=smem, size = 0x4, offset = 0x4, fixed_abs, tag = 'smem constant byte address 0x4 - core index']
  #allocation1 [shape = 'u32[144,128]{1,0:T(1,128)}', space=vmem, size = 0x12000, scoped, tag = 'internal scratch']
  #allocation2 [shape = 'f32[1,1]{1,0:T(1,128)S(6)}', space=smem, size = 0x200, scoped, tag = 'scoped memory for gat_forward.1']
  %s0 = inlined_call_operand.<no memory space> [shape: f32[1,1], index: 0, kind: input, shape index: {}]
  %s1 = inlined_call_operand.vmem [shape: f32[32,8], index: 1, kind: input, shape index: {}]
  %s2 = inlined_call_operand.vmem [shape: f32[32,32], index: 2, kind: input, shape index: {}]
  %s3 = inlined_call_operand.vmem [shape: f32[8,16], index: 3, kind: input, shape index: {}]
  %s4 = inlined_call_operand.vmem [shape: f32[16,2], index: 4, kind: input, shape index: {}]
  %s5 = inlined_call_operand.vmem [shape: f32[16,2], index: 5, kind: input, shape index: {}]
  %s6 = inlined_call_operand.vmem [shape: f32[16,16], index: 6, kind: input, shape index: {}]
  %s7 = inlined_call_operand.vmem [shape: f32[16,2], index: 7, kind: input, shape index: {}]
  %s8 = inlined_call_operand.vmem [shape: f32[16,2], index: 8, kind: input, shape index: {}]
  %s9 = inlined_call_operand.vmem [shape: f32[16,4], index: 9, kind: input, shape index: {}]
  %s10 = inlined_call_operand.vmem [shape: f32[1,4], index: 10, kind: input, shape index: {}]
  %s11 = inlined_call_operand.hbm [shape: f32[16,16], index: 11, kind: output, shape index: {0}]
  %s12 = inlined_call_operand.vmem [shape: f32[16,4], index: 12, kind: output, shape index: {1}]
  %13 = xla_tuple %s11, %s12
  %s14 = sld [smem:[#allocation0]]
  $region62: #{gat_forward.1} parent=0
    _
  %s16 = ssub.s32 1, %s14
  %s17 = scalar_select 0, %s16, %s14
  %18 = sst [smem:[#allocation2]] %s0
  $region1: #{gat_forward.1} parent=0
    #allocation3 [shape = 'u8[8192]{0}', space=vmem, size = 0x2000, scoped, tag = 'output window, operand 0, single buffered']
    #allocation4 [shape = 's32[1]{0}', space=sflag, size = 0x4, scoped, tag = 'scoped memory for gat_forward.1']
    %19 = vsyncpa [#allocation4], 0
    // Predicated region
    $region2: #{gat_forward.1} parent=1 // pred_check
      _
    $region3: #{gat_forward.1} parent=1 // pred_check_branch
      %21 = sbr.rel (0) target = $region5
    $region4: #{gat_forward.1} parent=1 // pred_region
      _
    $region5: #{gat_forward.1} parent=1 // pred_fallthru
      _
    // Predicated region
    $region6: #{gat_forward.1} parent=1 // pred_check
      _
    $region7: #{gat_forward.1} parent=1 // pred_check_branch
      %23 = sbr.rel (0) target = $region9
    $region8: #{gat_forward.1} parent=1 // pred_region
      _
    $region9: #{gat_forward.1} parent=1 // pred_fallthru
      _
    // Predicated region
    $region10: #{gat_forward.1} parent=1 // pred_check
      _
    $region11: #{gat_forward.1} parent=1 // pred_check_branch
      %25 = sbr.rel (0) target = $region13
    $region12: #{gat_forward.1} parent=1 // pred_region
      _
    $region13: #{gat_forward.1} parent=1 // pred_fallthru
      _
    // Predicated region
    $region14: #{gat_forward.1} parent=1 // pred_check
      _
    $region15: #{gat_forward.1} parent=1 // pred_check_branch
      %27 = sbr.rel (0) target = $region17
    $region16: #{gat_forward.1} parent=1 // pred_region
      _
    $region17: #{gat_forward.1} parent=1 // pred_fallthru
      _
    // Predicated region
    $region18: #{gat_forward.1} parent=1 // pred_check
      _
    $region19: #{gat_forward.1} parent=1 // pred_check_branch
      %29 = sbr.rel (0) target = $region21
    $region20: #{gat_forward.1} parent=1 // pred_region
      _
    $region21: #{gat_forward.1} parent=1 // pred_fallthru
      _
    // Predicated region
    $region22: #{gat_forward.1} parent=1 // pred_check
      _
    $region23: #{gat_forward.1} parent=1 // pred_check_branch
      %31 = sbr.rel (0) target = $region25
    $region24: #{gat_forward.1} parent=1 // pred_region
      _
    $region25: #{gat_forward.1} parent=1 // pred_fallthru
      _
    // Predicated region
    $region26: #{gat_forward.1} parent=1 // pred_check
      _
    $region27: #{gat_forward.1} parent=1 // pred_check_branch
      %33 = sbr.rel (0) target = $region29
    $region28: #{gat_forward.1} parent=1 // pred_region
      _
    $region29: #{gat_forward.1} parent=1 // pred_fallthru
      _
    // Predicated region
    $region30: #{gat_forward.1} parent=1 // pred_check
      _
    $region31: #{gat_forward.1} parent=1 // pred_check_branch
      %35 = sbr.rel (0) target = $region33
    $region32: #{gat_forward.1} parent=1 // pred_region
      _
    $region33: #{gat_forward.1} parent=1 // pred_fallthru
      _
    // Predicated region
    $region34: #{gat_forward.1} parent=1 // pred_check
      _
    $region35: #{gat_forward.1} parent=1 // pred_check_branch
      %37 = sbr.rel (0) target = $region37
    $region36: #{gat_forward.1} parent=1 // pred_region
      _
    $region37: #{gat_forward.1} parent=1 // pred_fallthru
      _
    // Predicated region
    $region38: #{gat_forward.1} parent=1 // pred_check
      _
    $region39: #{gat_forward.1} parent=1 // pred_check_branch
      %39 = sbr.rel (0) target = $region41
    $region40: #{gat_forward.1} parent=1 // pred_region
      _
    $region41: #{gat_forward.1} parent=1 // pred_fallthru
      _
    // Predicated region
    $region42: #{gat_forward.1} parent=1 // pred_check
      _
    $region43: #{gat_forward.1} parent=1 // pred_check_branch
      %41 = sbr.rel (0) target = $region45
    $region44: #{gat_forward.1} parent=1 // pred_region
      _
    $region45: #{gat_forward.1} parent=1 // pred_fallthru
      _
    %v42 = vld [vmem:[%s2] sm:$0xff]
    %v43 = vld [vmem:[%s2 + $0x8] sm:$0xff]
    %v44 = vld [vmem:[%s2 + $0x10] sm:$0xff]
    %v45 = vld [vmem:[%s2 + $0x18] sm:$0xff]
    %vm46 = vcmp.gt.f32.partialorder %v42, 0.0
    %vm47 = vcmp.gt.f32.partialorder %v43, 0.0
    %vm48 = vcmp.gt.f32.partialorder %v44, 0.0
    %vm49 = vcmp.gt.f32.partialorder %v45, 0.0
    %v50 = vld [vmem:[%s1] sm:$0xff]
    %v51 = vld [vmem:[%s1 + $0x8] sm:$0xff]
    %v52 = vld [vmem:[%s1 + $0x10] sm:$0xff]
    %v53 = vld [vmem:[%s1 + $0x18] sm:$0xff]
    %v54 = vld [vmem:[%s3] sm:$0xff]
    %v55 = vld [vmem:[%s4] sm:$0xff]
    %v56 = vld [vmem:[%s4 + $0x8] sm:$0xff]
    %v57 = vld [vmem:[%s5] sm:$0xff]
    %v58 = vld [vmem:[%s5 + $0x8] sm:$0xff]
    %vm59 = vcmask 64512
    %v61 = vsel %vm59, %v50, 0
    %v64 = vsel %vm59, %v51, 0
    %v67 = vsel %vm59, %v52, 0
    %v70 = vsel %vm59, %v53, 0
    %72 = vmatprep.subr.mxu0 0.0
    %73 = vmatpush1.msra.mxu0 %v54
    %74 = vmatprep.subr.mxu0 0.0
    %75 = vmatpush1.msra.mxu0 0.0
    %76 = vmatprep.subr.mxu0 0.0
    %77 = vmatpush1.msra.mxu0 0.0
    %78 = vmatprep.subr.mxu0 0.0
    %79 = vmatpush1.msra.mxu0 0.0
    %80 = vmatprep.subr.mxu0 0.0
    %81 = vmatpush1.msra.mxu0 0.0
    %82 = vmatprep.subr.mxu0 0.0
    %83 = vmatpush1.msra.mxu0 0.0
    %84 = vmatprep.subr.mxu0 0.0
    %85 = vmatpush1.msra.mxu0 0.0
    %86 = vmatprep.subr.mxu0 0.0
    %87 = vmatpush1.msra.mxu0 0.0
    %88 = vmatprep.subr.mxu0 0.0
    %89 = vmatpush1.msra.mxu0 0.0
    %90 = vmatprep.subr.mxu0 0.0
    %91 = vmatpush1.msra.mxu0 0.0
    %92 = vmatprep.subr.mxu0 0.0
    %93 = vmatpush1.msra.mxu0 0.0
    %94 = vmatprep.subr.mxu0 0.0
    %95 = vmatpush1.msra.mxu0 0.0
    %96 = vmatprep.subr.mxu0 0.0
    %97 = vmatpush1.msra.mxu0 0.0
    %98 = vmatprep.subr.mxu0 0.0
    %99 = vmatpush1.msra.mxu0 0.0
    %100 = vmatprep.subr.mxu0 0.0
    %101 = vmatpush1.msra.mxu0 0.0
    %102 = vmatprep.subr.mxu0 0.0
    %103 = vmatpush1.msra.mxu0 0.0
    %104 = vmatprep.subr.mxu0 0.0
    %105 = vmatpush1.msra.mxu0 0.0
    %106 = vmatprep.subr.mxu0 0.0
    %107 = vmatpush1.msra.mxu0 0.0
    %108 = vmatprep.subr.mxu0 0.0
    %109 = vmatpush1.msra.mxu0 0.0
    %110 = vmatprep.subr.mxu0 0.0
    %111 = vmatpush1.msra.mxu0 0.0
    %112 = vmatprep.subr.mxu0 0.0
    %113 = vmatpush1.msra.mxu0 0.0
    %114 = vmatprep.subr.mxu0 0.0
    %115 = vmatpush1.msra.mxu0 0.0
    %116 = vmatprep.subr.mxu0 0.0
    %117 = vmatpush1.msra.mxu0 0.0
    %118 = vmatprep.subr.mxu0 0.0
    %119 = vmatpush1.msra.mxu0 0.0
    %120 = vmatprep.subr.mxu0 0.0
    %121 = vmatpush1.msra.mxu0 0.0
    %122 = vmatprep.subr.mxu0 0.0
    %123 = vmatpush1.msra.mxu0 0.0
    %124 = vmatprep.subr.mxu0 0.0
    %125 = vmatpush1.msra.mxu0 0.0
    %126 = vmatprep.subr.mxu0 0.0
    %127 = vmatpush1.msra.mxu0 0.0
    %128 = vmatprep.subr.mxu0 0.0
    %129 = vmatpush1.msra.mxu0 0.0
    %130 = vmatprep.subr.mxu0 0.0
    %131 = vmatpush1.msra.mxu0 0.0
    %132 = vmatprep.subr.mxu0 0.0
    %133 = vmatpush1.msra.mxu0 0.0
    %134 = vmatprep.subr.mxu0 0.0
    %135 = vmatpush1.msra.mxu0 0.0
    %136 = vmatprep.mubr.f32.mxu0 0.0
    %137 = vmatmul.mubr.f32.gmra.mrb[0].mxu0 %v61
    %v138 = vpop.f32.mrb[0].mxu0
    %v139 = vadd.f32 0.0, %v138
    %v140 = vpop.f32.mrb[0].mxu0
    %141 = vmatprep.mubr.f32.mxu0 0.0
    %142 = vmatmul.mubr.f32.gmra.mrb[0].mxu0 %v64
    %v143 = vpop.f32.mrb[0].mxu0
    %v144 = vadd.f32 0.0, %v143
    %v145 = vpop.f32.mrb[0].mxu0
    %146 = vmatprep.mubr.f32.mxu0 0.0
    %147 = vmatmul.mubr.f32.gmra.mrb[0].mxu0 %v67
    %v148 = vpop.f32.mrb[0].mxu0
    %v149 = vadd.f32 0.0, %v148
    %v150 = vpop.f32.mrb[0].mxu0
    %151 = vmatprep.mubr.f32.mxu0 0.0
    %152 = vmatmul.mubr.f32.gmra.mrb[0].mxu0 %v70
    %v153 = vpop.f32.mrb[0].mxu0
    %v154 = vadd.f32 0.0, %v153
    %v155 = vpop.f32.mrb[0].mxu0
    %156 = vdwg.mxu0
    %vm157 = vcmask 130048
    %v159 = vsel %vm157, %v139, 0
    %v162 = vsel %vm157, %v144, 0
    %v165 = vsel %vm157, %v149, 0
    %v168 = vsel %vm157, %v154, 0
    %170 = vmatprep.subr.mxu0 0.0
    %171 = vmatpush1.msra.mxu0 %v55
    %172 = vmatprep.subr.mxu0 0.0
    %173 = vmatpush1.msra.mxu0 %v56
    %174 = vmatprep.subr.mxu0 0.0
    %175 = vmatpush1.msra.mxu0 0.0
    %176 = vmatprep.subr.mxu0 0.0
    %177 = vmatpush1.msra.mxu0 0.0
    %178 = vmatprep.subr.mxu0 0.0
    %179 = vmatpush1.msra.mxu0 0.0
    %180 = vmatprep.subr.mxu0 0.0
    %181 = vmatpush1.msra.mxu0 0.0
    %182 = vmatprep.subr.mxu0 0.0
    %183 = vmatpush1.msra.mxu0 0.0
    %184 = vmatprep.subr.mxu0 0.0
    %185 = vmatpush1.msra.mxu0 0.0
    %186 = vmatprep.subr.mxu0 0.0
    %187 = vmatpush1.msra.mxu0 0.0
    %188 = vmatprep.subr.mxu0 0.0
    %189 = vmatpush1.msra.mxu0 0.0
    %190 = vmatprep.subr.mxu0 0.0
    %191 = vmatpush1.msra.mxu0 0.0
    %192 = vmatprep.subr.mxu0 0.0
    %193 = vmatpush1.msra.mxu0 0.0
    %194 = vmatprep.subr.mxu0 0.0
    %195 = vmatpush1.msra.mxu0 0.0
    %196 = vmatprep.subr.mxu0 0.0
    %197 = vmatpush1.msra.mxu0 0.0
    %198 = vmatprep.subr.mxu0 0.0
    %199 = vmatpush1.msra.mxu0 0.0
    %200 = vmatprep.subr.mxu0 0.0
    %201 = vmatpush1.msra.mxu0 0.0
    %202 = vmatprep.subr.mxu0 0.0
    %203 = vmatpush1.msra.mxu0 0.0
    %204 = vmatprep.subr.mxu0 0.0
    %205 = vmatpush1.msra.mxu0 0.0
    %206 = vmatprep.subr.mxu0 0.0
    %207 = vmatpush1.msra.mxu0 0.0
    %208 = vmatprep.subr.mxu0 0.0
    %209 = vmatpush1.msra.mxu0 0.0
    %210 = vmatprep.subr.mxu0 0.0
    %211 = vmatpush1.msra.mxu0 0.0
    %212 = vmatprep.subr.mxu0 0.0
    %213 = vmatpush1.msra.mxu0 0.0
    %214 = vmatprep.subr.mxu0 0.0
    %215 = vmatpush1.msra.mxu0 0.0
    %216 = vmatprep.subr.mxu0 0.0
    %217 = vmatpush1.msra.mxu0 0.0
    %218 = vmatprep.subr.mxu0 0.0
    %219 = vmatpush1.msra.mxu0 0.0
    %220 = vmatprep.subr.mxu0 0.0
    %221 = vmatpush1.msra.mxu0 0.0
    %222 = vmatprep.subr.mxu0 0.0
    %223 = vmatpush1.msra.mxu0 0.0
    %224 = vmatprep.subr.mxu0 0.0
    %225 = vmatpush1.msra.mxu0 0.0
    %226 = vmatprep.subr.mxu0 0.0
    %227 = vmatpush1.msra.mxu0 0.0
    %228 = vmatprep.subr.mxu0 0.0
    %229 = vmatpush1.msra.mxu0 0.0
    %230 = vmatprep.subr.mxu0 0.0
    %231 = vmatpush1.msra.mxu0 0.0
    %232 = vmatprep.subr.mxu0 0.0
    %233 = vmatpush1.msra.mxu0 0.0
    %234 = vmatprep.mubr.f32.mxu0 0.0
    %235 = vmatmul.mubr.f32.gmra.mrb[0].mxu0 %v159
    %v236 = vpop.f32.mrb[0].mxu0
    %v237 = vadd.f32 0.0, %v236
    %v238 = vpop.f32.mrb[0].mxu0
    %239 = vmatprep.mubr.f32.mxu0 0.0
    %240 = vmatmul.mubr.f32.gmra.mrb[0].mxu0 %v162
    %v241 = vpop.f32.mrb[0].mxu0
    %v242 = vadd.f32 0.0, %v241
    %v243 = vpop.f32.mrb[0].mxu0
    %244 = vmatprep.mubr.f32.mxu0 0.0
    %245 = vmatmul.mubr.f32.gmra.mrb[0].mxu0 %v165
    %v246 = vpop.f32.mrb[0].mxu0
    %v247 = vadd.f32 0.0, %v246
    %v248 = vpop.f32.mrb[0].mxu0
    %249 = vmatprep.mubr.f32.mxu0 0.0
    %250 = vmatmul.mubr.f32.gmra.mrb[0].mxu0 %v168
    %v251 = vpop.f32.mrb[0].mxu0
    %v252 = vadd.f32 0.0, %v251
    %v253 = vpop.f32.mrb[0].mxu0
    %254 = vdwg.mxu0
    %255 = vmatprep.subr.mxu0 0.0
    %256 = vmatpush1.msra.mxu0 %v57
    %257 = vmatprep.subr.mxu0 0.0
    %258 = vmatpush1.msra.mxu0 %v58
    %259 = vmatprep.subr.mxu0 0.0
    %260 = vmatpush1.msra.mxu0 0.0
    %261 = vmatprep.subr.mxu0 0.0
    %262 = vmatpush1.msra.mxu0 0.0
    %263 = vmatprep.subr.mxu0 0.0
    %264 = vmatpush1.msra.mxu0 0.0
    %265 = vmatprep.subr.mxu0 0.0
    %266 = vmatpush1.msra.mxu0 0.0
    %267 = vmatprep.subr.mxu0 0.0
    %268 = vmatpush1.msra.mxu0 0.0
    %269 = vmatprep.subr.mxu0 0.0
    %270 = vmatpush1.msra.mxu0 0.0
    %271 = vmatprep.subr.mxu0 0.0
    %272 = vmatpush1.msra.mxu0 0.0
    %273 = vmatprep.subr.mxu0 0.0
    %274 = vmatpush1.msra.mxu0 0.0
    %275 = vmatprep.subr.mxu0 0.0
    %276 = vmatpush1.msra.mxu0 0.0
    %277 = vmatprep.subr.mxu0 0.0
    %278 = vmatpush1.msra.mxu0 0.0
    %279 = vmatprep.subr.mxu0 0.0
    %280 = vmatpush1.msra.mxu0 0.0
    %281 = vmatprep.subr.mxu0 0.0
    %282 = vmatpush1.msra.mxu0 0.0
    %283 = vmatprep.subr.mxu0 0.0
    %284 = vmatpush1.msra.mxu0 0.0
    %285 = vmatprep.subr.mxu0 0.0
    %286 = vmatpush1.msra.mxu0 0.0
    %287 = vmatprep.subr.mxu0 0.0
    %288 = vmatpush1.msra.mxu0 0.0
    %289 = vmatprep.subr.mxu0 0.0
    %290 = vmatpush1.msra.mxu0 0.0
    %291 = vmatprep.subr.mxu0 0.0
    %292 = vmatpush1.msra.mxu0 0.0
    %293 = vmatprep.subr.mxu0 0.0
    %294 = vmatpush1.msra.mxu0 0.0
    %295 = vmatprep.subr.mxu0 0.0
    %296 = vmatpush1.msra.mxu0 0.0
    %297 = vmatprep.subr.mxu0 0.0
    %298 = vmatpush1.msra.mxu0 0.0
    %299 = vmatprep.subr.mxu0 0.0
    %300 = vmatpush1.msra.mxu0 0.0
    %301 = vmatprep.subr.mxu0 0.0
    %302 = vmatpush1.msra.mxu0 0.0
    %303 = vmatprep.subr.mxu0 0.0
    %304 = vmatpush1.msra.mxu0 0.0
    %305 = vmatprep.subr.mxu0 0.0
    %306 = vmatpush1.msra.mxu0 0.0
    %307 = vmatprep.subr.mxu0 0.0
    %308 = vmatpush1.msra.mxu0 0.0
    %309 = vmatprep.subr.mxu0 0.0
    %310 = vmatpush1.msra.mxu0 0.0
    %311 = vmatprep.subr.mxu0 0.0
    %312 = vmatpush1.msra.mxu0 0.0
    %313 = vmatprep.subr.mxu0 0.0
    %314 = vmatpush1.msra.mxu0 0.0
    %315 = vmatprep.subr.mxu0 0.0
    %316 = vmatpush1.msra.mxu0 0.0
    %317 = vmatprep.subr.mxu0 0.0
    %318 = vmatpush1.msra.mxu0 0.0
    %319 = vmatprep.mubr.f32.mxu0 0.0
    %320 = vmatmul.mubr.f32.gmra.mrb[0].mxu0 %v159
    %v321 = vpop.f32.mrb[0].mxu0
    %v322 = vadd.f32 0.0, %v321
    %v323 = vpop.f32.mrb[0].mxu0
    %324 = vmatprep.mubr.f32.mxu0 0.0
    %325 = vmatmul.mubr.f32.gmra.mrb[0].mxu0 %v162
    %v326 = vpop.f32.mrb[0].mxu0
    %v327 = vadd.f32 0.0, %v326
    %v328 = vpop.f32.mrb[0].mxu0
    %329 = vmatprep.mubr.f32.mxu0 0.0
    %330 = vmatmul.mubr.f32.gmra.mrb[0].mxu0 %v165
    %v331 = vpop.f32.mrb[0].mxu0
    %v332 = vadd.f32 0.0, %v331
    %v333 = vpop.f32.mrb[0].mxu0
    %334 = vmatprep.mubr.f32.mxu0 0.0
    %335 = vmatmul.mubr.f32.gmra.mrb[0].mxu0 %v168
    %v336 = vpop.f32.mrb[0].mxu0
    %v337 = vadd.f32 0.0, %v336
    %v338 = vpop.f32.mrb[0].mxu0
    %339 = vdwg.mxu0
    %340 = vxpose.xlu0.b32.start [1/16] %v237, 128
    %341 = vxpose.xlu0.b32.cont [2/16] %v242, 128
    %342 = vxpose.xlu0.b32.cont [3/16] %v247, 128
    %343 = vxpose.xlu0.b32.cont [4/16] %v252, 128
    %344 = vxpose.xlu0.b32.cont [5/16] 0.0, 128
    %345 = vxpose.xlu0.b32.cont [6/16] 0.0, 128
    %346 = vxpose.xlu0.b32.cont [7/16] 0.0, 128
    %347 = vxpose.xlu0.b32.cont [8/16] 0.0, 128
    %348 = vxpose.xlu0.b32.cont [9/16] 0.0, 128
    %349 = vxpose.xlu0.b32.cont [10/16] 0.0, 128
    %350 = vxpose.xlu0.b32.cont [11/16] 0.0, 128
    %351 = vxpose.xlu0.b32.cont [12/16] 0.0, 128
    %352 = vxpose.xlu0.b32.cont [13/16] 0.0, 128
    %353 = vxpose.xlu0.b32.cont [14/16] 0.0, 128
    %354 = vxpose.xlu0.b32.cont [15/16] 0.0, 128
    %355 = vxpose.xlu0.b32.end [16/16] 0.0, 128
    %v356 = vpop.trf.xlu0
    %v357 = vpop.trf.xlu0
    %v358 = vpop.trf.xlu0
    %v359 = vpop.trf.xlu0
    %v360 = vpop.trf.xlu0
    %v361 = vpop.trf.xlu0
    %v362 = vpop.trf.xlu0
    %v363 = vpop.trf.xlu0
    %v364 = vpop.trf.xlu0
    %v365 = vpop.trf.xlu0
    %v366 = vpop.trf.xlu0
    %v367 = vpop.trf.xlu0
    %v368 = vpop.trf.xlu0
    %v369 = vpop.trf.xlu0
    %v370 = vpop.trf.xlu0
    %v371 = vpop.trf.xlu0
    %373 = vset.pattern.permute.xlu0 0
    %374 = vperm.xlu0 %373, %v322
    %v375 = vpop.permute.xlu0 %374
    %378 = vset.pattern.permute.xlu0 0
    %379 = vperm.xlu0 %378, %v327
    %v380 = vpop.permute.xlu0 %379
    %383 = vset.pattern.permute.xlu0 0
    %384 = vperm.xlu0 %383, %v332
    %v385 = vpop.permute.xlu0 %384
    %388 = vset.pattern.permute.xlu0 0
    %389 = vperm.xlu0 %388, %v337
    %v390 = vpop.permute.xlu0 %389
    %v392 = vlaneseq
    %v393 = vshrl.u32 %v392, 7
    %v394 = vsub.s32 0, %v393
    %v395 = vrot.slane %v356, %v394
    %v396 = vadd.f32 %v375, %v395
    %v397 = vadd.f32 %v380, %v395
    %v398 = vadd.f32 %v385, %v395
    %v399 = vadd.f32 %v390, %v395
    %v400 = vmul.f32 %v396, 0.2
    %v401 = vmul.f32 %v397, 0.2
    %v402 = vmul.f32 %v398, 0.2
    %v403 = vmul.f32 %v399, 0.2
    %v404 = vmax.f32 %v396, %v400
    %v405 = vmax.f32 %v397, %v401
    %v406 = vmax.f32 %v398, %v402
    %v407 = vmax.f32 %v399, %v403
    %v408 = vsel %vm46, %v404, -1e+30
    %v409 = vsel %vm47, %v405, -1e+30
    %v410 = vsel %vm48, %v406, -1e+30
    %v411 = vsel %vm49, %v407, -1e+30
    %vm412 = vcmask 261120
    %v413 = vsel %vm412, %v408, -inf
    %414 = vmax.xlane.f32.xlu0 %v413
    %v415 = vpop.xlane.xlu0 %414
    %v416 = vsel %vm412, %v409, -inf
    %417 = vmax.xlane.f32.xlu0 %v416
    %v418 = vpop.xlane.xlu0 %417
    %v419 = vsel %vm412, %v410, -inf
    %420 = vmax.xlane.f32.xlu0 %v419
    %v421 = vpop.xlane.xlu0 %420
    %v422 = vsel %vm412, %v411, -inf
    %423 = vmax.xlane.f32.xlu0 %v422
    %v424 = vpop.xlane.xlu0 %423
    %v425 = vsub.f32 %v408, %v415
    %v426 = vsub.f32 %v409, %v418
    %v427 = vsub.f32 %v410, %v421
    %v428 = vsub.f32 %v411, %v424
    %v429 = vmul.f32 %v425, 1.442695
    %v430 = vpow.pop %v429
    %v431 = vmul.f32 %v426, 1.442695
    %v432 = vpow.pop %v431
    %v433 = vmul.f32 %v427, 1.442695
    %v434 = vpow.pop %v433
    %v435 = vmul.f32 %v428, 1.442695
    %v436 = vpow.pop %v435
    %v437 = vsel %vm412, %v430, 0.0
    %438 = vadd.xlane.f32.xlu0 %v437
    %v439 = vpop.xlane.xlu0 %438
    %v440 = vsel %vm412, %v432, 0.0
    %441 = vadd.xlane.f32.xlu0 %v440
    %v442 = vpop.xlane.xlu0 %441
    %v443 = vsel %vm412, %v434, 0.0
    %444 = vadd.xlane.f32.xlu0 %v443
    %v445 = vpop.xlane.xlu0 %444
    %v446 = vsel %vm412, %v436, 0.0
    %447 = vadd.xlane.f32.xlu0 %v446
    %v448 = vpop.xlane.xlu0 %447
    %v449 = vrcp.pop %v439
    %v450 = vrcp.pop %v442
    %v451 = vrcp.pop %v445
    %v452 = vrcp.pop %v448
    %v453 = vmul.f32 %v430, %v449
    %v454 = vmul.f32 %v432, %v450
    %v455 = vmul.f32 %v434, %v451
    %v456 = vmul.f32 %v436, %v452
    %v458 = vsel %vm412, %v453, 0
    %v461 = vsel %vm412, %v454, 0
    %v464 = vsel %vm412, %v455, 0
    %v467 = vsel %vm412, %v456, 0
    %469 = vmatprep.subr.mxu0 0.0
    %470 = vmatpush1.msra.mxu0 %v139
    %471 = vmatprep.subr.mxu0 0.0
    %472 = vmatpush1.msra.mxu0 %v144
    %473 = vmatprep.subr.mxu0 0.0
    %474 = vmatpush1.msra.mxu0 %v149
    %475 = vmatprep.subr.mxu0 0.0
    %476 = vmatpush1.msra.mxu0 %v154
    %477 = vmatprep.subr.mxu0 0.0
    %478 = vmatpush1.msra.mxu0 0.0
    %479 = vmatprep.subr.mxu0 0.0
    %480 = vmatpush1.msra.mxu0 0.0
    %481 = vmatprep.subr.mxu0 0.0
    %482 = vmatpush1.msra.mxu0 0.0
    %483 = vmatprep.subr.mxu0 0.0
    %484 = vmatpush1.msra.mxu0 0.0
    %485 = vmatprep.subr.mxu0 0.0
    %486 = vmatpush1.msra.mxu0 0.0
    %487 = vmatprep.subr.mxu0 0.0
    %488 = vmatpush1.msra.mxu0 0.0
    %489 = vmatprep.subr.mxu0 0.0
    %490 = vmatpush1.msra.mxu0 0.0
    %491 = vmatprep.subr.mxu0 0.0
    %492 = vmatpush1.msra.mxu0 0.0
    %493 = vmatprep.subr.mxu0 0.0
    %494 = vmatpush1.msra.mxu0 0.0
    %495 = vmatprep.subr.mxu0 0.0
    %496 = vmatpush1.msra.mxu0 0.0
    %497 = vmatprep.subr.mxu0 0.0
    %498 = vmatpush1.msra.mxu0 0.0
    %499 = vmatprep.subr.mxu0 0.0
    %500 = vmatpush1.msra.mxu0 0.0
    %501 = vmatprep.subr.mxu0 0.0
    %502 = vmatpush1.msra.mxu0 0.0
    %503 = vmatprep.subr.mxu0 0.0
    %504 = vmatpush1.msra.mxu0 0.0
    %505 = vmatprep.subr.mxu0 0.0
    %506 = vmatpush1.msra.mxu0 0.0
    %507 = vmatprep.subr.mxu0 0.0
    %508 = vmatpush1.msra.mxu0 0.0
    %509 = vmatprep.subr.mxu0 0.0
    %510 = vmatpush1.msra.mxu0 0.0
    %511 = vmatprep.subr.mxu0 0.0
    %512 = vmatpush1.msra.mxu0 0.0
    %513 = vmatprep.subr.mxu0 0.0
    %514 = vmatpush1.msra.mxu0 0.0
    %515 = vmatprep.subr.mxu0 0.0
    %516 = vmatpush1.msra.mxu0 0.0
    %517 = vmatprep.subr.mxu0 0.0
    %518 = vmatpush1.msra.mxu0 0.0
    %519 = vmatprep.subr.mxu0 0.0
    %520 = vmatpush1.msra.mxu0 0.0
    %521 = vmatprep.subr.mxu0 0.0
    %522 = vmatpush1.msra.mxu0 0.0
    %523 = vmatprep.subr.mxu0 0.0
    %524 = vmatpush1.msra.mxu0 0.0
    %525 = vmatprep.subr.mxu0 0.0
    %526 = vmatpush1.msra.mxu0 0.0
    %527 = vmatprep.subr.mxu0 0.0
    %528 = vmatpush1.msra.mxu0 0.0
    %529 = vmatprep.subr.mxu0 0.0
    %530 = vmatpush1.msra.mxu0 0.0
    %531 = vmatprep.subr.mxu0 0.0
    %532 = vmatpush1.msra.mxu0 0.0
    %533 = vmatprep.mubr.f32.mxu0 0.0
    %534 = vmatmul.mubr.f32.gmra.mrb[0].mxu0 %v458
    %v535 = vpop.f32.mrb[0].mxu0
    %v536 = vadd.f32 0.0, %v535
    %v537 = vpop.f32.mrb[0].mxu0
    %538 = vmatprep.mubr.f32.mxu0 0.0
    %539 = vmatmul.mubr.f32.gmra.mrb[0].mxu0 %v461
    %v540 = vpop.f32.mrb[0].mxu0
    %v541 = vadd.f32 0.0, %v540
    %v542 = vpop.f32.mrb[0].mxu0
    %543 = vmatprep.mubr.f32.mxu0 0.0
    %544 = vmatmul.mubr.f32.gmra.mrb[0].mxu0 %v464
    %v545 = vpop.f32.mrb[0].mxu0
    %v546 = vadd.f32 0.0, %v545
    %v547 = vpop.f32.mrb[0].mxu0
    %548 = vmatprep.mubr.f32.mxu0 0.0
    %549 = vmatmul.mubr.f32.gmra.mrb[0].mxu0 %v467
    %v550 = vpop.f32.mrb[0].mxu0
    %v551 = vadd.f32 0.0, %v550
    %v552 = vpop.f32.mrb[0].mxu0
    %553 = vdwg.mxu0
    %554 = vset.pattern.permute.xlu0 1
    %555 = vperm.xlu0 %554, %v322
    %v556 = vpop.permute.xlu0 %555
    %558 = vset.pattern.permute.xlu0 1
    %559 = vperm.xlu0 %558, %v327
    %v560 = vpop.permute.xlu0 %559
    %562 = vset.pattern.permute.xlu0 1
    %563 = vperm.xlu0 %562, %v332
    %v564 = vpop.permute.xlu0 %563
    %566 = vset.pattern.permute.xlu0 1
    %567 = vperm.xlu0 %566, %v337
    %v568 = vpop.permute.xlu0 %567
    %v570 = vlaneseq
    %v571 = vshrl.u32 %v570, 7
    %v572 = vsub.s32 1, %v571
    %v573 = vrot.slane %v356, %v572
    %v574 = vadd.f32 %v556, %v573
    %v575 = vadd.f32 %v560, %v573
    %v576 = vadd.f32 %v564, %v573
    %v577 = vadd.f32 %v568, %v573
    %v578 = vmul.f32 %v574, 0.2
    %v579 = vmul.f32 %v575, 0.2
    %v580 = vmul.f32 %v576, 0.2
    %v581 = vmul.f32 %v577, 0.2
    %v582 = vmax.f32 %v574, %v578
    %v583 = vmax.f32 %v575, %v579
    %v584 = vmax.f32 %v576, %v580
    %v585 = vmax.f32 %v577, %v581
    %v586 = vsel %vm46, %v582, -1e+30
    %v587 = vsel %vm47, %v583, -1e+30
    %v588 = vsel %vm48, %v584, -1e+30
    %v589 = vsel %vm49, %v585, -1e+30
    %v590 = vsel %vm412, %v586, -inf
    %591 = vmax.xlane.f32.xlu0 %v590
    %v592 = vpop.xlane.xlu0 %591
    %v593 = vsel %vm412, %v587, -inf
    %594 = vmax.xlane.f32.xlu0 %v593
    %v595 = vpop.xlane.xlu0 %594
    %v596 = vsel %vm412, %v588, -inf
    %597 = vmax.xlane.f32.xlu0 %v596
    %v598 = vpop.xlane.xlu0 %597
    %v599 = vsel %vm412, %v589, -inf
    %600 = vmax.xlane.f32.xlu0 %v599
    %v601 = vpop.xlane.xlu0 %600
    %v602 = vsub.f32 %v586, %v592
    %v603 = vsub.f32 %v587, %v595
    %v604 = vsub.f32 %v588, %v598
    %v605 = vsub.f32 %v589, %v601
    %v606 = vmul.f32 %v602, 1.442695
    %v607 = vpow.pop %v606
    %v608 = vmul.f32 %v603, 1.442695
    %v609 = vpow.pop %v608
    %v610 = vmul.f32 %v604, 1.442695
    %v611 = vpow.pop %v610
    %v612 = vmul.f32 %v605, 1.442695
    %v613 = vpow.pop %v612
    %v614 = vsel %vm412, %v607, 0.0
    %615 = vadd.xlane.f32.xlu0 %v614
    %v616 = vpop.xlane.xlu0 %615
    %v617 = vsel %vm412, %v609, 0.0
    %618 = vadd.xlane.f32.xlu0 %v617
    %v619 = vpop.xlane.xlu0 %618
    %v620 = vsel %vm412, %v611, 0.0
    %621 = vadd.xlane.f32.xlu0 %v620
    %v622 = vpop.xlane.xlu0 %621
    %v623 = vsel %vm412, %v613, 0.0
    %624 = vadd.xlane.f32.xlu0 %v623
    %v625 = vpop.xlane.xlu0 %624
    %v626 = vrcp.pop %v616
    %v627 = vrcp.pop %v619
    %v628 = vrcp.pop %v622
    %v629 = vrcp.pop %v625
    %v630 = vmul.f32 %v607, %v626
    %v631 = vmul.f32 %v609, %v627
    %v632 = vmul.f32 %v611, %v628
    %v633 = vmul.f32 %v613, %v629
    %634 = vrot.lane.b32.xlu0 %v139, 120
    %v635 = vpop.permute.xlu0 %634
    %636 = vrot.lane.b32.xlu0 %v144, 120
    %v637 = vpop.permute.xlu0 %636
    %638 = vrot.lane.b32.xlu0 %v149, 120
    %v639 = vpop.permute.xlu0 %638
    %640 = vrot.lane.b32.xlu0 %v154, 120
    %v641 = vpop.permute.xlu0 %640
    %v647 = vsel %vm412, %v630, 0
    %v650 = vsel %vm412, %v631, 0
    %v653 = vsel %vm412, %v632, 0
    %v656 = vsel %vm412, %v633, 0
    %658 = vmatprep.subr.mxu0 0.0
    %659 = vmatpush1.msra.mxu0 %v635
    %660 = vmatprep.subr.mxu0 0.0
    %661 = vmatpush1.msra.mxu0 %v637
    %662 = vmatprep.subr.mxu0 0.0
    %663 = vmatpush1.msra.mxu0 %v639
    %664 = vmatprep.subr.mxu0 0.0
    %665 = vmatpush1.msra.mxu0 %v641
    %666 = vmatprep.subr.mxu0 0.0
    %667 = vmatpush1.msra.mxu0 0.0
    %668 = vmatprep.subr.mxu0 0.0
    %669 = vmatpush1.msra.mxu0 0.0
    %670 = vmatprep.subr.mxu0 0.0
    %671 = vmatpush1.msra.mxu0 0.0
    %672 = vmatprep.subr.mxu0 0.0
    %673 = vmatpush1.msra.mxu0 0.0
    %674 = vmatprep.subr.mxu0 0.0
    %675 = vmatpush1.msra.mxu0 0.0
    %676 = vmatprep.subr.mxu0 0.0
    %677 = vmatpush1.msra.mxu0 0.0
    %678 = vmatprep.subr.mxu0 0.0
    %679 = vmatpush1.msra.mxu0 0.0
    %680 = vmatprep.subr.mxu0 0.0
    %681 = vmatpush1.msra.mxu0 0.0
    %682 = vmatprep.subr.mxu0 0.0
    %683 = vmatpush1.msra.mxu0 0.0
    %684 = vmatprep.subr.mxu0 0.0
    %685 = vmatpush1.msra.mxu0 0.0
    %686 = vmatprep.subr.mxu0 0.0
    %687 = vmatpush1.msra.mxu0 0.0
    %688 = vmatprep.subr.mxu0 0.0
    %689 = vmatpush1.msra.mxu0 0.0
    %690 = vmatprep.subr.mxu0 0.0
    %691 = vmatpush1.msra.mxu0 0.0
    %692 = vmatprep.subr.mxu0 0.0
    %693 = vmatpush1.msra.mxu0 0.0
    %694 = vmatprep.subr.mxu0 0.0
    %695 = vmatpush1.msra.mxu0 0.0
    %696 = vmatprep.subr.mxu0 0.0
    %697 = vmatpush1.msra.mxu0 0.0
    %698 = vmatprep.subr.mxu0 0.0
    %699 = vmatpush1.msra.mxu0 0.0
    %700 = vmatprep.subr.mxu0 0.0
    %701 = vmatpush1.msra.mxu0 0.0
    %702 = vmatprep.subr.mxu0 0.0
    %703 = vmatpush1.msra.mxu0 0.0
    %704 = vmatprep.subr.mxu0 0.0
    %705 = vmatpush1.msra.mxu0 0.0
    %706 = vmatprep.subr.mxu0 0.0
    %707 = vmatpush1.msra.mxu0 0.0
    %708 = vmatprep.subr.mxu0 0.0
    %709 = vmatpush1.msra.mxu0 0.0
    %710 = vmatprep.subr.mxu0 0.0
    %711 = vmatpush1.msra.mxu0 0.0
    %712 = vmatprep.subr.mxu0 0.0
    %713 = vmatpush1.msra.mxu0 0.0
    %714 = vmatprep.subr.mxu0 0.0
    %715 = vmatpush1.msra.mxu0 0.0
    %716 = vmatprep.subr.mxu0 0.0
    %717 = vmatpush1.msra.mxu0 0.0
    %718 = vmatprep.subr.mxu0 0.0
    %719 = vmatpush1.msra.mxu0 0.0
    %720 = vmatprep.subr.mxu0 0.0
    %721 = vmatpush1.msra.mxu0 0.0
    %722 = vmatprep.mubr.f32.mxu0 0.0
    %723 = vmatmul.mubr.f32.gmra.mrb[0].mxu0 %v647
    %v724 = vpop.f32.mrb[0].mxu0
    %v725 = vadd.f32 0.0, %v724
    %v726 = vpop.f32.mrb[0].mxu0
    %727 = vmatprep.mubr.f32.mxu0 0.0
    %728 = vmatmul.mubr.f32.gmra.mrb[0].mxu0 %v650
    %v729 = vpop.f32.mrb[0].mxu0
    %v730 = vadd.f32 0.0, %v729
    %v731 = vpop.f32.mrb[0].mxu0
    %732 = vmatprep.mubr.f32.mxu0 0.0
    %733 = vmatmul.mubr.f32.gmra.mrb[0].mxu0 %v653
    %v734 = vpop.f32.mrb[0].mxu0
    %v735 = vadd.f32 0.0, %v734
    %v736 = vpop.f32.mrb[0].mxu0
    %737 = vmatprep.mubr.f32.mxu0 0.0
    %738 = vmatmul.mubr.f32.gmra.mrb[0].mxu0 %v656
    %v739 = vpop.f32.mrb[0].mxu0
    %v740 = vadd.f32 0.0, %v739
    %v741 = vpop.f32.mrb[0].mxu0
    %742 = vdwg.mxu0
    %747 = vrot.lane.b32.xlu0 %v725, 8
    %v748 = vpop.permute.xlu0 %747
    %749 = vrot.lane.b32.xlu0 %v730, 8
    %v750 = vpop.permute.xlu0 %749
    %751 = vrot.lane.b32.xlu0 %v735, 8
    %v752 = vpop.permute.xlu0 %751
    %753 = vrot.lane.b32.xlu0 %v740, 8
    %v754 = vpop.permute.xlu0 %753
    %v759 = vsel %vm59, %v536, %v748
    %v760 = vsel %vm59, %v541, %v750
    %v761 = vsel %vm59, %v546, %v752
    %v762 = vsel %vm59, %v551, %v754
    %vm763 = vcmp.gt.f32.partialorder %v759, 0.0
    %vm764 = vcmp.gt.f32.partialorder %v760, 0.0
    %vm765 = vcmp.gt.f32.partialorder %v761, 0.0
    %vm766 = vcmp.gt.f32.partialorder %v762, 0.0
    %v767 = vmin.f32 %v759, 0.0
    %v768 = vmin.f32 %v760, 0.0
    %v769 = vmin.f32 %v761, 0.0
    %v770 = vmin.f32 %v762, 0.0
    %v771 = vmul.f32 %v767, 1.442695
    %v772 = vpow.pop %v771
    %v773 = vmul.f32 %v768, 1.442695
    %v774 = vpow.pop %v773
    %v775 = vmul.f32 %v769, 1.442695
    %v776 = vpow.pop %v775
    %v777 = vmul.f32 %v770, 1.442695
    %v778 = vpow.pop %v777
    %v779 = vsub.f32 %v772, 1.0
    %v780 = vsub.f32 %v774, 1.0
    %v781 = vsub.f32 %v776, 1.0
    %v782 = vsub.f32 %v778, 1.0
    %v783 = vsel %vm763, %v759, %v779
    %v784 = vsel %vm764, %v760, %v780
    %v785 = vsel %vm765, %v761, %v781
    %v786 = vsel %vm766, %v762, %v782
    %v787 = vld [vmem:[%s6] sm:$0xff]
    %v788 = vld [vmem:[%s6 + $0x8] sm:$0xff]
    %v789 = vld [vmem:[%s7] sm:$0xff]
    %v790 = vld [vmem:[%s7 + $0x8] sm:$0xff]
    %v791 = vld [vmem:[%s8] sm:$0xff]
    %v792 = vld [vmem:[%s8 + $0x8] sm:$0xff]
    %v794 = vsel %vm157, %v783, 0
    %v797 = vsel %vm157, %v784, 0
    %v800 = vsel %vm157, %v785, 0
    %v803 = vsel %vm157, %v786, 0
    %805 = vmatprep.subr.mxu0 0.0
    %806 = vmatpush1.msra.mxu0 %v787
    %807 = vmatprep.subr.mxu0 0.0
    %808 = vmatpush1.msra.mxu0 %v788
    %809 = vmatprep.subr.mxu0 0.0
    %810 = vmatpush1.msra.mxu0 0.0
    %811 = vmatprep.subr.mxu0 0.0
    %812 = vmatpush1.msra.mxu0 0.0
    %813 = vmatprep.subr.mxu0 0.0
    %814 = vmatpush1.msra.mxu0 0.0
    %815 = vmatprep.subr.mxu0 0.0
    %816 = vmatpush1.msra.mxu0 0.0
    %817 = vmatprep.subr.mxu0 0.0
    %818 = vmatpush1.msra.mxu0 0.0
    %819 = vmatprep.subr.mxu0 0.0
    %820 = vmatpush1.msra.mxu0 0.0
    %821 = vmatprep.subr.mxu0 0.0
    %822 = vmatpush1.msra.mxu0 0.0
    %823 = vmatprep.subr.mxu0 0.0
    %824 = vmatpush1.msra.mxu0 0.0
    %825 = vmatprep.subr.mxu0 0.0
    %826 = vmatpush1.msra.mxu0 0.0
    %827 = vmatprep.subr.mxu0 0.0
    %828 = vmatpush1.msra.mxu0 0.0
    %829 = vmatprep.subr.mxu0 0.0
    %830 = vmatpush1.msra.mxu0 0.0
    %831 = vmatprep.subr.mxu0 0.0
    %832 = vmatpush1.msra.mxu0 0.0
    %833 = vmatprep.subr.mxu0 0.0
    %834 = vmatpush1.msra.mxu0 0.0
    %835 = vmatprep.subr.mxu0 0.0
    %836 = vmatpush1.msra.mxu0 0.0
    %837 = vmatprep.subr.mxu0 0.0
    %838 = vmatpush1.msra.mxu0 0.0
    %839 = vmatprep.subr.mxu0 0.0
    %840 = vmatpush1.msra.mxu0 0.0
    %841 = vmatprep.subr.mxu0 0.0
    %842 = vmatpush1.msra.mxu0 0.0
    %843 = vmatprep.subr.mxu0 0.0
    %844 = vmatpush1.msra.mxu0 0.0
    %845 = vmatprep.subr.mxu0 0.0
    %846 = vmatpush1.msra.mxu0 0.0
    %847 = vmatprep.subr.mxu0 0.0
    %848 = vmatpush1.msra.mxu0 0.0
    %849 = vmatprep.subr.mxu0 0.0
    %850 = vmatpush1.msra.mxu0 0.0
    %851 = vmatprep.subr.mxu0 0.0
    %852 = vmatpush1.msra.mxu0 0.0
    %853 = vmatprep.subr.mxu0 0.0
    %854 = vmatpush1.msra.mxu0 0.0
    %855 = vmatprep.subr.mxu0 0.0
    %856 = vmatpush1.msra.mxu0 0.0
    %857 = vmatprep.subr.mxu0 0.0
    %858 = vmatpush1.msra.mxu0 0.0
    %859 = vmatprep.subr.mxu0 0.0
    %860 = vmatpush1.msra.mxu0 0.0
    %861 = vmatprep.subr.mxu0 0.0
    %862 = vmatpush1.msra.mxu0 0.0
    %863 = vmatprep.subr.mxu0 0.0
    %864 = vmatpush1.msra.mxu0 0.0
    %865 = vmatprep.subr.mxu0 0.0
    %866 = vmatpush1.msra.mxu0 0.0
    %867 = vmatprep.subr.mxu0 0.0
    %868 = vmatpush1.msra.mxu0 0.0
    %869 = vmatprep.mubr.f32.mxu0 0.0
    %870 = vmatmul.mubr.f32.gmra.mrb[0].mxu0 %v794
    %v871 = vpop.f32.mrb[0].mxu0
    %v872 = vadd.f32 0.0, %v871
    %v873 = vpop.f32.mrb[0].mxu0
    %874 = vmatprep.mubr.f32.mxu0 0.0
    %875 = vmatmul.mubr.f32.gmra.mrb[0].mxu0 %v797
    %v876 = vpop.f32.mrb[0].mxu0
    %v877 = vadd.f32 0.0, %v876
    %v878 = vpop.f32.mrb[0].mxu0
    %879 = vmatprep.mubr.f32.mxu0 0.0
    %880 = vmatmul.mubr.f32.gmra.mrb[0].mxu0 %v800
    %v881 = vpop.f32.mrb[0].mxu0
    %v882 = vadd.f32 0.0, %v881
    %v883 = vpop.f32.mrb[0].mxu0
    %884 = vmatprep.mubr.f32.mxu0 0.0
    %885 = vmatmul.mubr.f32.gmra.mrb[0].mxu0 %v803
    %v886 = vpop.f32.mrb[0].mxu0
    %v887 = vadd.f32 0.0, %v886
    %v888 = vpop.f32.mrb[0].mxu0
    %889 = vdwg.mxu0
    %v891 = vsel %vm157, %v872, 0
    %v894 = vsel %vm157, %v877, 0
    %v897 = vsel %vm157, %v882, 0
    %v900 = vsel %vm157, %v887, 0
    %902 = vmatprep.subr.mxu0 0.0
    %903 = vmatpush1.msra.mxu0 %v789
    %904 = vmatprep.subr.mxu0 0.0
    %905 = vmatpush1.msra.mxu0 %v790
    %906 = vmatprep.subr.mxu0 0.0
    %907 = vmatpush1.msra.mxu0 0.0
    %908 = vmatprep.subr.mxu0 0.0
    %909 = vmatpush1.msra.mxu0 0.0
    %910 = vmatprep.subr.mxu0 0.0
    %911 = vmatpush1.msra.mxu0 0.0
    %912 = vmatprep.subr.mxu0 0.0
    %913 = vmatpush1.msra.mxu0 0.0
    %914 = vmatprep.subr.mxu0 0.0
    %915 = vmatpush1.msra.mxu0 0.0
    %916 = vmatprep.subr.mxu0 0.0
    %917 = vmatpush1.msra.mxu0 0.0
    %918 = vmatprep.subr.mxu0 0.0
    %919 = vmatpush1.msra.mxu0 0.0
    %920 = vmatprep.subr.mxu0 0.0
    %921 = vmatpush1.msra.mxu0 0.0
    %922 = vmatprep.subr.mxu0 0.0
    %923 = vmatpush1.msra.mxu0 0.0
    %924 = vmatprep.subr.mxu0 0.0
    %925 = vmatpush1.msra.mxu0 0.0
    %926 = vmatprep.subr.mxu0 0.0
    %927 = vmatpush1.msra.mxu0 0.0
    %928 = vmatprep.subr.mxu0 0.0
    %929 = vmatpush1.msra.mxu0 0.0
    %930 = vmatprep.subr.mxu0 0.0
    %931 = vmatpush1.msra.mxu0 0.0
    %932 = vmatprep.subr.mxu0 0.0
    %933 = vmatpush1.msra.mxu0 0.0
    %934 = vmatprep.subr.mxu0 0.0
    %935 = vmatpush1.msra.mxu0 0.0
    %936 = vmatprep.subr.mxu0 0.0
    %937 = vmatpush1.msra.mxu0 0.0
    %938 = vmatprep.subr.mxu0 0.0
    %939 = vmatpush1.msra.mxu0 0.0
    %940 = vmatprep.subr.mxu0 0.0
    %941 = vmatpush1.msra.mxu0 0.0
    %942 = vmatprep.subr.mxu0 0.0
    %943 = vmatpush1.msra.mxu0 0.0
    %944 = vmatprep.subr.mxu0 0.0
    %945 = vmatpush1.msra.mxu0 0.0
    %946 = vmatprep.subr.mxu0 0.0
    %947 = vmatpush1.msra.mxu0 0.0
    %948 = vmatprep.subr.mxu0 0.0
    %949 = vmatpush1.msra.mxu0 0.0
    %950 = vmatprep.subr.mxu0 0.0
    %951 = vmatpush1.msra.mxu0 0.0
    %952 = vmatprep.subr.mxu0 0.0
    %953 = vmatpush1.msra.mxu0 0.0
    %954 = vmatprep.subr.mxu0 0.0
    %955 = vmatpush1.msra.mxu0 0.0
    %956 = vmatprep.subr.mxu0 0.0
    %957 = vmatpush1.msra.mxu0 0.0
    %958 = vmatprep.subr.mxu0 0.0
    %959 = vmatpush1.msra.mxu0 0.0
    %960 = vmatprep.subr.mxu0 0.0
    %961 = vmatpush1.msra.mxu0 0.0
    %962 = vmatprep.subr.mxu0 0.0
    %963 = vmatpush1.msra.mxu0 0.0
    %964 = vmatprep.subr.mxu0 0.0
    %965 = vmatpush1.msra.mxu0 0.0
    %966 = vmatprep.mubr.f32.mxu0 0.0
    %967 = vmatmul.mubr.f32.gmra.mrb[0].mxu0 %v891
    %v968 = vpop.f32.mrb[0].mxu0
    %v969 = vadd.f32 0.0, %v968
    %v970 = vpop.f32.mrb[0].mxu0
    %971 = vmatprep.mubr.f32.mxu0 0.0
    %972 = vmatmul.mubr.f32.gmra.mrb[0].mxu0 %v894
    %v973 = vpop.f32.mrb[0].mxu0
    %v974 = vadd.f32 0.0, %v973
    %v975 = vpop.f32.mrb[0].mxu0
    %976 = vmatprep.mubr.f32.mxu0 0.0
    %977 = vmatmul.mubr.f32.gmra.mrb[0].mxu0 %v897
    %v978 = vpop.f32.mrb[0].mxu0
    %v979 = vadd.f32 0.0, %v978
    %v980 = vpop.f32.mrb[0].mxu0
    %981 = vmatprep.mubr.f32.mxu0 0.0
    %982 = vmatmul.mubr.f32.gmra.mrb[0].mxu0 %v900
    %v983 = vpop.f32.mrb[0].mxu0
    %v984 = vadd.f32 0.0, %v983
    %v985 = vpop.f32.mrb[0].mxu0
    %986 = vdwg.mxu0
    %987 = vmatprep.subr.mxu0 0.0
    %988 = vmatpush1.msra.mxu0 %v791
    %989 = vmatprep.subr.mxu0 0.0
    %990 = vmatpush1.msra.mxu0 %v792
    %991 = vmatprep.subr.mxu0 0.0
    %992 = vmatpush1.msra.mxu0 0.0
    %993 = vmatprep.subr.mxu0 0.0
    %994 = vmatpush1.msra.mxu0 0.0
    %995 = vmatprep.subr.mxu0 0.0
    %996 = vmatpush1.msra.mxu0 0.0
    %997 = vmatprep.subr.mxu0 0.0
    %998 = vmatpush1.msra.mxu0 0.0
    %999 = vmatprep.subr.mxu0 0.0
    %1000 = vmatpush1.msra.mxu0 0.0
    %1001 = vmatprep.subr.mxu0 0.0
    %1002 = vmatpush1.msra.mxu0 0.0
    %1003 = vmatprep.subr.mxu0 0.0
    %1004 = vmatpush1.msra.mxu0 0.0
    %1005 = vmatprep.subr.mxu0 0.0
    %1006 = vmatpush1.msra.mxu0 0.0
    %1007 = vmatprep.subr.mxu0 0.0
    %1008 = vmatpush1.msra.mxu0 0.0
    %1009 = vmatprep.subr.mxu0 0.0
    %1010 = vmatpush1.msra.mxu0 0.0
    %1011 = vmatprep.subr.mxu0 0.0
    %1012 = vmatpush1.msra.mxu0 0.0
    %1013 = vmatprep.subr.mxu0 0.0
    %1014 = vmatpush1.msra.mxu0 0.0
    %1015 = vmatprep.subr.mxu0 0.0
    %1016 = vmatpush1.msra.mxu0 0.0
    %1017 = vmatprep.subr.mxu0 0.0
    %1018 = vmatpush1.msra.mxu0 0.0
    %1019 = vmatprep.subr.mxu0 0.0
    %1020 = vmatpush1.msra.mxu0 0.0
    %1021 = vmatprep.subr.mxu0 0.0
    %1022 = vmatpush1.msra.mxu0 0.0
    %1023 = vmatprep.subr.mxu0 0.0
    %1024 = vmatpush1.msra.mxu0 0.0
    %1025 = vmatprep.subr.mxu0 0.0
    %1026 = vmatpush1.msra.mxu0 0.0
    %1027 = vmatprep.subr.mxu0 0.0
    %1028 = vmatpush1.msra.mxu0 0.0
    %1029 = vmatprep.subr.mxu0 0.0
    %1030 = vmatpush1.msra.mxu0 0.0
    %1031 = vmatprep.subr.mxu0 0.0
    %1032 = vmatpush1.msra.mxu0 0.0
    %1033 = vmatprep.subr.mxu0 0.0
    %1034 = vmatpush1.msra.mxu0 0.0
    %1035 = vmatprep.subr.mxu0 0.0
    %1036 = vmatpush1.msra.mxu0 0.0
    %1037 = vmatprep.subr.mxu0 0.0
    %1038 = vmatpush1.msra.mxu0 0.0
    %1039 = vmatprep.subr.mxu0 0.0
    %1040 = vmatpush1.msra.mxu0 0.0
    %1041 = vmatprep.subr.mxu0 0.0
    %1042 = vmatpush1.msra.mxu0 0.0
    %1043 = vmatprep.subr.mxu0 0.0
    %1044 = vmatpush1.msra.mxu0 0.0
    %1045 = vmatprep.subr.mxu0 0.0
    %1046 = vmatpush1.msra.mxu0 0.0
    %1047 = vmatprep.subr.mxu0 0.0
    %1048 = vmatpush1.msra.mxu0 0.0
    %1049 = vmatprep.subr.mxu0 0.0
    %1050 = vmatpush1.msra.mxu0 0.0
    %1051 = vmatprep.mubr.f32.mxu0 0.0
    %1052 = vmatmul.mubr.f32.gmra.mrb[0].mxu0 %v891
    %v1053 = vpop.f32.mrb[0].mxu0
    %v1054 = vadd.f32 0.0, %v1053
    %v1055 = vpop.f32.mrb[0].mxu0
    %1056 = vmatprep.mubr.f32.mxu0 0.0
    %1057 = vmatmul.mubr.f32.gmra.mrb[0].mxu0 %v894
    %v1058 = vpop.f32.mrb[0].mxu0
    %v1059 = vadd.f32 0.0, %v1058
    %v1060 = vpop.f32.mrb[0].mxu0
    %1061 = vmatprep.mubr.f32.mxu0 0.0
    %1062 = vmatmul.mubr.f32.gmra.mrb[0].mxu0 %v897
    %v1063 = vpop.f32.mrb[0].mxu0
    %v1064 = vadd.f32 0.0, %v1063
    %v1065 = vpop.f32.mrb[0].mxu0
    %1066 = vmatprep.mubr.f32.mxu0 0.0
    %1067 = vmatmul.mubr.f32.gmra.mrb[0].mxu0 %v900
    %v1068 = vpop.f32.mrb[0].mxu0
    %v1069 = vadd.f32 0.0, %v1068
    %v1070 = vpop.f32.mrb[0].mxu0
    %1071 = vdwg.mxu0
    %1072 = vxpose.xlu0.b32.start [1/16] %v969, 128
    %1073 = vxpose.xlu0.b32.cont [2/16] %v974, 128
    %1074 = vxpose.xlu0.b32.cont [3/16] %v979, 128
    %1075 = vxpose.xlu0.b32.cont [4/16] %v984, 128
    %1076 = vxpose.xlu0.b32.cont [5/16] 0.0, 128
    %1077 = vxpose.xlu0.b32.cont [6/16] 0.0, 128
    %1078 = vxpose.xlu0.b32.cont [7/16] 0.0, 128
    %1079 = vxpose.xlu0.b32.cont [8/16] 0.0, 128
    %1080 = vxpose.xlu0.b32.cont [9/16] 0.0, 128
    %1081 = vxpose.xlu0.b32.cont [10/16] 0.0, 128
    %1082 = vxpose.xlu0.b32.cont [11/16] 0.0, 128
    %1083 = vxpose.xlu0.b32.cont [12/16] 0.0, 128
    %1084 = vxpose.xlu0.b32.cont [13/16] 0.0, 128
    %1085 = vxpose.xlu0.b32.cont [14/16] 0.0, 128
    %1086 = vxpose.xlu0.b32.cont [15/16] 0.0, 128
    %1087 = vxpose.xlu0.b32.end [16/16] 0.0, 128
    %v1088 = vpop.trf.xlu0
    %v1089 = vpop.trf.xlu0
    %v1090 = vpop.trf.xlu0
    %v1091 = vpop.trf.xlu0
    %v1092 = vpop.trf.xlu0
    %v1093 = vpop.trf.xlu0
    %v1094 = vpop.trf.xlu0
    %v1095 = vpop.trf.xlu0
    %v1096 = vpop.trf.xlu0
    %v1097 = vpop.trf.xlu0
    %v1098 = vpop.trf.xlu0
    %v1099 = vpop.trf.xlu0
    %v1100 = vpop.trf.xlu0
    %v1101 = vpop.trf.xlu0
    %v1102 = vpop.trf.xlu0
    %v1103 = vpop.trf.xlu0
    %1105 = vset.pattern.permute.xlu0 0
    %1106 = vperm.xlu0 %1105, %v1054
    %v1107 = vpop.permute.xlu0 %1106
    %1110 = vset.pattern.permute.xlu0 0
    %1111 = vperm.xlu0 %1110, %v1059
    %v1112 = vpop.permute.xlu0 %1111
    %1115 = vset.pattern.permute.xlu0 0
    %1116 = vperm.xlu0 %1115, %v1064
    %v1117 = vpop.permute.xlu0 %1116
    %1120 = vset.pattern.permute.xlu0 0
    %1121 = vperm.xlu0 %1120, %v1069
    %v1122 = vpop.permute.xlu0 %1121
    %v1124 = vlaneseq
    %v1125 = vshrl.u32 %v1124, 7
    %v1126 = vsub.s32 0, %v1125
    %v1127 = vrot.slane %v1088, %v1126
    %v1128 = vadd.f32 %v1107, %v1127
    %v1129 = vadd.f32 %v1112, %v1127
    %v1130 = vadd.f32 %v1117, %v1127
    %v1131 = vadd.f32 %v1122, %v1127
    %v1132 = vmul.f32 %v1128, 0.2
    %v1133 = vmul.f32 %v1129, 0.2
    %v1134 = vmul.f32 %v1130, 0.2
    %v1135 = vmul.f32 %v1131, 0.2
    %v1136 = vmax.f32 %v1128, %v1132
    %v1137 = vmax.f32 %v1129, %v1133
    %v1138 = vmax.f32 %v1130, %v1134
    %v1139 = vmax.f32 %v1131, %v1135
    %v1140 = vsel %vm46, %v1136, -1e+30
    %v1141 = vsel %vm47, %v1137, -1e+30
    %v1142 = vsel %vm48, %v1138, -1e+30
    %v1143 = vsel %vm49, %v1139, -1e+30
    %v1144 = vsel %vm412, %v1140, -inf
    %1145 = vmax.xlane.f32.xlu0 %v1144
    %v1146 = vpop.xlane.xlu0 %1145
    %v1147 = vsel %vm412, %v1141, -inf
    %1148 = vmax.xlane.f32.xlu0 %v1147
    %v1149 = vpop.xlane.xlu0 %1148
    %v1150 = vsel %vm412, %v1142, -inf
    %1151 = vmax.xlane.f32.xlu0 %v1150
    %v1152 = vpop.xlane.xlu0 %1151
    %v1153 = vsel %vm412, %v1143, -inf
    %1154 = vmax.xlane.f32.xlu0 %v1153
    %v1155 = vpop.xlane.xlu0 %1154
    %v1156 = vsub.f32 %v1140, %v1146
    %v1157 = vsub.f32 %v1141, %v1149
    %v1158 = vsub.f32 %v1142, %v1152
    %v1159 = vsub.f32 %v1143, %v1155
    %v1160 = vmul.f32 %v1156, 1.442695
    %v1161 = vpow.pop %v1160
    %v1162 = vmul.f32 %v1157, 1.442695
    %v1163 = vpow.pop %v1162
    %v1164 = vmul.f32 %v1158, 1.442695
    %v1165 = vpow.pop %v1164
    %v1166 = vmul.f32 %v1159, 1.442695
    %v1167 = vpow.pop %v1166
    %v1168 = vsel %vm412, %v1161, 0.0
    %1169 = vadd.xlane.f32.xlu0 %v1168
    %v1170 = vpop.xlane.xlu0 %1169
    %v1171 = vsel %vm412, %v1163, 0.0
    %1172 = vadd.xlane.f32.xlu0 %v1171
    %v1173 = vpop.xlane.xlu0 %1172
    %v1174 = vsel %vm412, %v1165, 0.0
    %1175 = vadd.xlane.f32.xlu0 %v1174
    %v1176 = vpop.xlane.xlu0 %1175
    %v1177 = vsel %vm412, %v1167, 0.0
    %1178 = vadd.xlane.f32.xlu0 %v1177
    %v1179 = vpop.xlane.xlu0 %1178
    %v1180 = vrcp.pop %v1170
    %v1181 = vrcp.pop %v1173
    %v1182 = vrcp.pop %v1176
    %v1183 = vrcp.pop %v1179
    %v1184 = vmul.f32 %v1161, %v1180
    %v1185 = vmul.f32 %v1163, %v1181
    %v1186 = vmul.f32 %v1165, %v1182
    %v1187 = vmul.f32 %v1167, %v1183
    %v1189 = vsel %vm412, %v1184, 0
    %v1192 = vsel %vm412, %v1185, 0
    %v1195 = vsel %vm412, %v1186, 0
    %v1198 = vsel %vm412, %v1187, 0
    %1200 = vmatprep.subr.mxu0 0.0
    %1201 = vmatpush1.msra.mxu0 %v872
    %1202 = vmatprep.subr.mxu0 0.0
    %1203 = vmatpush1.msra.mxu0 %v877
    %1204 = vmatprep.subr.mxu0 0.0
    %1205 = vmatpush1.msra.mxu0 %v882
    %1206 = vmatprep.subr.mxu0 0.0
    %1207 = vmatpush1.msra.mxu0 %v887
    %1208 = vmatprep.subr.mxu0 0.0
    %1209 = vmatpush1.msra.mxu0 0.0
    %1210 = vmatprep.subr.mxu0 0.0
    %1211 = vmatpush1.msra.mxu0 0.0
    %1212 = vmatprep.subr.mxu0 0.0
    %1213 = vmatpush1.msra.mxu0 0.0
    %1214 = vmatprep.subr.mxu0 0.0
    %1215 = vmatpush1.msra.mxu0 0.0
    %1216 = vmatprep.subr.mxu0 0.0
    %1217 = vmatpush1.msra.mxu0 0.0
    %1218 = vmatprep.subr.mxu0 0.0
    %1219 = vmatpush1.msra.mxu0 0.0
    %1220 = vmatprep.subr.mxu0 0.0
    %1221 = vmatpush1.msra.mxu0 0.0
    %1222 = vmatprep.subr.mxu0 0.0
    %1223 = vmatpush1.msra.mxu0 0.0
    %1224 = vmatprep.subr.mxu0 0.0
    %1225 = vmatpush1.msra.mxu0 0.0
    %1226 = vmatprep.subr.mxu0 0.0
    %1227 = vmatpush1.msra.mxu0 0.0
    %1228 = vmatprep.subr.mxu0 0.0
    %1229 = vmatpush1.msra.mxu0 0.0
    %1230 = vmatprep.subr.mxu0 0.0
    %1231 = vmatpush1.msra.mxu0 0.0
    %1232 = vmatprep.subr.mxu0 0.0
    %1233 = vmatpush1.msra.mxu0 0.0
    %1234 = vmatprep.subr.mxu0 0.0
    %1235 = vmatpush1.msra.mxu0 0.0
    %1236 = vmatprep.subr.mxu0 0.0
    %1237 = vmatpush1.msra.mxu0 0.0
    %1238 = vmatprep.subr.mxu0 0.0
    %1239 = vmatpush1.msra.mxu0 0.0
    %1240 = vmatprep.subr.mxu0 0.0
    %1241 = vmatpush1.msra.mxu0 0.0
    %1242 = vmatprep.subr.mxu0 0.0
    %1243 = vmatpush1.msra.mxu0 0.0
    %1244 = vmatprep.subr.mxu0 0.0
    %1245 = vmatpush1.msra.mxu0 0.0
    %1246 = vmatprep.subr.mxu0 0.0
    %1247 = vmatpush1.msra.mxu0 0.0
    %1248 = vmatprep.subr.mxu0 0.0
    %1249 = vmatpush1.msra.mxu0 0.0
    %1250 = vmatprep.subr.mxu0 0.0
    %1251 = vmatpush1.msra.mxu0 0.0
    %1252 = vmatprep.subr.mxu0 0.0
    %1253 = vmatpush1.msra.mxu0 0.0
    %1254 = vmatprep.subr.mxu0 0.0
    %1255 = vmatpush1.msra.mxu0 0.0
    %1256 = vmatprep.subr.mxu0 0.0
    %1257 = vmatpush1.msra.mxu0 0.0
    %1258 = vmatprep.subr.mxu0 0.0
    %1259 = vmatpush1.msra.mxu0 0.0
    %1260 = vmatprep.subr.mxu0 0.0
    %1261 = vmatpush1.msra.mxu0 0.0
    %1262 = vmatprep.subr.mxu0 0.0
    %1263 = vmatpush1.msra.mxu0 0.0
    %1264 = vmatprep.mubr.f32.mxu0 0.0
    %1265 = vmatmul.mubr.f32.gmra.mrb[0].mxu0 %v1189
    %v1266 = vpop.f32.mrb[0].mxu0
    %v1267 = vadd.f32 0.0, %v1266
    %v1268 = vpop.f32.mrb[0].mxu0
    %1269 = vmatprep.mubr.f32.mxu0 0.0
    %1270 = vmatmul.mubr.f32.gmra.mrb[0].mxu0 %v1192
    %v1271 = vpop.f32.mrb[0].mxu0
    %v1272 = vadd.f32 0.0, %v1271
    %v1273 = vpop.f32.mrb[0].mxu0
    %1274 = vmatprep.mubr.f32.mxu0 0.0
    %1275 = vmatmul.mubr.f32.gmra.mrb[0].mxu0 %v1195
    %v1276 = vpop.f32.mrb[0].mxu0
    %v1277 = vadd.f32 0.0, %v1276
    %v1278 = vpop.f32.mrb[0].mxu0
    %1279 = vmatprep.mubr.f32.mxu0 0.0
    %1280 = vmatmul.mubr.f32.gmra.mrb[0].mxu0 %v1198
    %v1281 = vpop.f32.mrb[0].mxu0
    %v1282 = vadd.f32 0.0, %v1281
    %v1283 = vpop.f32.mrb[0].mxu0
    %1284 = vdwg.mxu0
    %1285 = vset.pattern.permute.xlu0 1
    %1286 = vperm.xlu0 %1285, %v1054
    %v1287 = vpop.permute.xlu0 %1286
    %1289 = vset.pattern.permute.xlu0 1
    %1290 = vperm.xlu0 %1289, %v1059
    %v1291 = vpop.permute.xlu0 %1290
    %1293 = vset.pattern.permute.xlu0 1
    %1294 = vperm.xlu0 %1293, %v1064
    %v1295 = vpop.permute.xlu0 %1294
    %1297 = vset.pattern.permute.xlu0 1
    %1298 = vperm.xlu0 %1297, %v1069
    %v1299 = vpop.permute.xlu0 %1298
    %v1301 = vlaneseq
    %v1302 = vshrl.u32 %v1301, 7
    %v1303 = vsub.s32 1, %v1302
    %v1304 = vrot.slane %v1088, %v1303
    %v1305 = vadd.f32 %v1287, %v1304
    %v1306 = vadd.f32 %v1291, %v1304
    %v1307 = vadd.f32 %v1295, %v1304
    %v1308 = vadd.f32 %v1299, %v1304
    %v1309 = vmul.f32 %v1305, 0.2
    %v1310 = vmul.f32 %v1306, 0.2
    %v1311 = vmul.f32 %v1307, 0.2
    %v1312 = vmul.f32 %v1308, 0.2
    %v1313 = vmax.f32 %v1305, %v1309
    %v1314 = vmax.f32 %v1306, %v1310
    %v1315 = vmax.f32 %v1307, %v1311
    %v1316 = vmax.f32 %v1308, %v1312
    %v1317 = vsel %vm46, %v1313, -1e+30
    %v1318 = vsel %vm47, %v1314, -1e+30
    %v1319 = vsel %vm48, %v1315, -1e+30
    %v1320 = vsel %vm49, %v1316, -1e+30
    %v1321 = vsel %vm412, %v1317, -inf
    %1322 = vmax.xlane.f32.xlu0 %v1321
    %v1323 = vpop.xlane.xlu0 %1322
    %v1324 = vsel %vm412, %v1318, -inf
    %1325 = vmax.xlane.f32.xlu0 %v1324
    %v1326 = vpop.xlane.xlu0 %1325
    %v1327 = vsel %vm412, %v1319, -inf
    %1328 = vmax.xlane.f32.xlu0 %v1327
    %v1329 = vpop.xlane.xlu0 %1328
    %v1330 = vsel %vm412, %v1320, -inf
    %1331 = vmax.xlane.f32.xlu0 %v1330
    %v1332 = vpop.xlane.xlu0 %1331
    %v1333 = vsub.f32 %v1317, %v1323
    %v1334 = vsub.f32 %v1318, %v1326
    %v1335 = vsub.f32 %v1319, %v1329
    %v1336 = vsub.f32 %v1320, %v1332
    %v1337 = vmul.f32 %v1333, 1.442695
    %v1338 = vpow.pop %v1337
    %v1339 = vmul.f32 %v1334, 1.442695
    %v1340 = vpow.pop %v1339
    %v1341 = vmul.f32 %v1335, 1.442695
    %v1342 = vpow.pop %v1341
    %v1343 = vmul.f32 %v1336, 1.442695
    %v1344 = vpow.pop %v1343
    %v1345 = vsel %vm412, %v1338, 0.0
    %1346 = vadd.xlane.f32.xlu0 %v1345
    %v1347 = vpop.xlane.xlu0 %1346
    %v1348 = vsel %vm412, %v1340, 0.0
    %1349 = vadd.xlane.f32.xlu0 %v1348
    %v1350 = vpop.xlane.xlu0 %1349
    %v1351 = vsel %vm412, %v1342, 0.0
    %1352 = vadd.xlane.f32.xlu0 %v1351
    %v1353 = vpop.xlane.xlu0 %1352
    %v1354 = vsel %vm412, %v1344, 0.0
    %1355 = vadd.xlane.f32.xlu0 %v1354
    %v1356 = vpop.xlane.xlu0 %1355
    %v1357 = vrcp.pop %v1347
    %v1358 = vrcp.pop %v1350
    %v1359 = vrcp.pop %v1353
    %v1360 = vrcp.pop %v1356
    %v1361 = vmul.f32 %v1338, %v1357
    %v1362 = vmul.f32 %v1340, %v1358
    %v1363 = vmul.f32 %v1342, %v1359
    %v1364 = vmul.f32 %v1344, %v1360
    %1365 = vrot.lane.b32.xlu0 %v872, 120
    %v1366 = vpop.permute.xlu0 %1365
    %1367 = vrot.lane.b32.xlu0 %v877, 120
    %v1368 = vpop.permute.xlu0 %1367
    %1369 = vrot.lane.b32.xlu0 %v882, 120
    %v1370 = vpop.permute.xlu0 %1369
    %1371 = vrot.lane.b32.xlu0 %v887, 120
    %v1372 = vpop.permute.xlu0 %1371
    %v1378 = vsel %vm412, %v1361, 0
    %v1381 = vsel %vm412, %v1362, 0
    %v1384 = vsel %vm412, %v1363, 0
    %v1387 = vsel %vm412, %v1364, 0
    %1389 = vmatprep.subr.mxu0 0.0
    %1390 = vmatpush1.msra.mxu0 %v1366
    %1391 = vmatprep.subr.mxu0 0.0
    %1392 = vmatpush1.msra.mxu0 %v1368
    %1393 = vmatprep.subr.mxu0 0.0
    %1394 = vmatpush1.msra.mxu0 %v1370
    %1395 = vmatprep.subr.mxu0 0.0
    %1396 = vmatpush1.msra.mxu0 %v1372
    %1397 = vmatprep.subr.mxu0 0.0
    %1398 = vmatpush1.msra.mxu0 0.0
    %1399 = vmatprep.subr.mxu0 0.0
    %1400 = vmatpush1.msra.mxu0 0.0
    %1401 = vmatprep.subr.mxu0 0.0
    %1402 = vmatpush1.msra.mxu0 0.0
    %1403 = vmatprep.subr.mxu0 0.0
    %1404 = vmatpush1.msra.mxu0 0.0
    %1405 = vmatprep.subr.mxu0 0.0
    %1406 = vmatpush1.msra.mxu0 0.0
    %1407 = vmatprep.subr.mxu0 0.0
    %1408 = vmatpush1.msra.mxu0 0.0
    %1409 = vmatprep.subr.mxu0 0.0
    %1410 = vmatpush1.msra.mxu0 0.0
    %1411 = vmatprep.subr.mxu0 0.0
    %1412 = vmatpush1.msra.mxu0 0.0
    %1413 = vmatprep.subr.mxu0 0.0
    %1414 = vmatpush1.msra.mxu0 0.0
    %1415 = vmatprep.subr.mxu0 0.0
    %1416 = vmatpush1.msra.mxu0 0.0
    %1417 = vmatprep.subr.mxu0 0.0
    %1418 = vmatpush1.msra.mxu0 0.0
    %1419 = vmatprep.subr.mxu0 0.0
    %1420 = vmatpush1.msra.mxu0 0.0
    %1421 = vmatprep.subr.mxu0 0.0
    %1422 = vmatpush1.msra.mxu0 0.0
    %1423 = vmatprep.subr.mxu0 0.0
    %1424 = vmatpush1.msra.mxu0 0.0
    %1425 = vmatprep.subr.mxu0 0.0
    %1426 = vmatpush1.msra.mxu0 0.0
    %1427 = vmatprep.subr.mxu0 0.0
    %1428 = vmatpush1.msra.mxu0 0.0
    %1429 = vmatprep.subr.mxu0 0.0
    %1430 = vmatpush1.msra.mxu0 0.0
    %1431 = vmatprep.subr.mxu0 0.0
    %1432 = vmatpush1.msra.mxu0 0.0
    %1433 = vmatprep.subr.mxu0 0.0
    %1434 = vmatpush1.msra.mxu0 0.0
    %1435 = vmatprep.subr.mxu0 0.0
    %1436 = vmatpush1.msra.mxu0 0.0
    %1437 = vmatprep.subr.mxu0 0.0
    %1438 = vmatpush1.msra.mxu0 0.0
    %1439 = vmatprep.subr.mxu0 0.0
    %1440 = vmatpush1.msra.mxu0 0.0
    %1441 = vmatprep.subr.mxu0 0.0
    %1442 = vmatpush1.msra.mxu0 0.0
    %1443 = vmatprep.subr.mxu0 0.0
    %1444 = vmatpush1.msra.mxu0 0.0
    %1445 = vmatprep.subr.mxu0 0.0
    %1446 = vmatpush1.msra.mxu0 0.0
    %1447 = vmatprep.subr.mxu0 0.0
    %1448 = vmatpush1.msra.mxu0 0.0
    %1449 = vmatprep.subr.mxu0 0.0
    %1450 = vmatpush1.msra.mxu0 0.0
    %1451 = vmatprep.subr.mxu0 0.0
    %1452 = vmatpush1.msra.mxu0 0.0
    %1453 = vmatprep.mubr.f32.mxu0 0.0
    %1454 = vmatmul.mubr.f32.gmra.mrb[0].mxu0 %v1378
    %v1455 = vpop.f32.mrb[0].mxu0
    %v1456 = vadd.f32 0.0, %v1455
    %v1457 = vpop.f32.mrb[0].mxu0
    %1458 = vmatprep.mubr.f32.mxu0 0.0
    %1459 = vmatmul.mubr.f32.gmra.mrb[0].mxu0 %v1381
    %v1460 = vpop.f32.mrb[0].mxu0
    %v1461 = vadd.f32 0.0, %v1460
    %v1462 = vpop.f32.mrb[0].mxu0
    %1463 = vmatprep.mubr.f32.mxu0 0.0
    %1464 = vmatmul.mubr.f32.gmra.mrb[0].mxu0 %v1384
    %v1465 = vpop.f32.mrb[0].mxu0
    %v1466 = vadd.f32 0.0, %v1465
    %v1467 = vpop.f32.mrb[0].mxu0
    %1468 = vmatprep.mubr.f32.mxu0 0.0
    %1469 = vmatmul.mubr.f32.gmra.mrb[0].mxu0 %v1387
    %v1470 = vpop.f32.mrb[0].mxu0
    %v1471 = vadd.f32 0.0, %v1470
    %v1472 = vpop.f32.mrb[0].mxu0
    %1473 = vdwg.mxu0
    %1478 = vrot.lane.b32.xlu0 %v1456, 8
    %v1479 = vpop.permute.xlu0 %1478
    %1480 = vrot.lane.b32.xlu0 %v1461, 8
    %v1481 = vpop.permute.xlu0 %1480
    %1482 = vrot.lane.b32.xlu0 %v1466, 8
    %v1483 = vpop.permute.xlu0 %1482
    %1484 = vrot.lane.b32.xlu0 %v1471, 8
    %v1485 = vpop.permute.xlu0 %1484
    %v1490 = vsel %vm59, %v1267, %v1479
    %v1491 = vsel %vm59, %v1272, %v1481
    %v1492 = vsel %vm59, %v1277, %v1483
    %v1493 = vsel %vm59, %v1282, %v1485
    %v1494 = vadd.f32 %v1490, %v783
    %v1495 = vadd.f32 %v1491, %v784
    %v1496 = vadd.f32 %v1492, %v785
    %v1497 = vadd.f32 %v1493, %v786
    %vm1498 = vcmp.gt.f32.partialorder %v1494, 0.0
    %vm1499 = vcmp.gt.f32.partialorder %v1495, 0.0
    %vm1500 = vcmp.gt.f32.partialorder %v1496, 0.0
    %vm1501 = vcmp.gt.f32.partialorder %v1497, 0.0
    %v1502 = vmin.f32 %v1494, 0.0
    %v1503 = vmin.f32 %v1495, 0.0
    %v1504 = vmin.f32 %v1496, 0.0
    %v1505 = vmin.f32 %v1497, 0.0
    %v1506 = vmul.f32 %v1502, 1.442695
    %v1507 = vpow.pop %v1506
    %v1508 = vmul.f32 %v1503, 1.442695
    %v1509 = vpow.pop %v1508
    %v1510 = vmul.f32 %v1504, 1.442695
    %v1511 = vpow.pop %v1510
    %v1512 = vmul.f32 %v1505, 1.442695
    %v1513 = vpow.pop %v1512
    %v1514 = vsub.f32 %v1507, 1.0
    %v1515 = vsub.f32 %v1509, 1.0
    %v1516 = vsub.f32 %v1511, 1.0
    %v1517 = vsub.f32 %v1513, 1.0
    %v1518 = vsel %vm1498, %v1494, %v1514
    %v1519 = vsel %vm1499, %v1495, %v1515
    %v1520 = vsel %vm1500, %v1496, %v1516
    %v1521 = vsel %vm1501, %v1497, %v1517
    %s1522 = sld [smem:[#allocation2]]
    %v1523 = vstv %s1522
    %v1524 = vmul.f32 %v1523, %v1518
    %v1525 = vmul.f32 %v1523, %v1519
    %s1526 = ssub.f32 1.0, %s1522
    %v1527 = vstv %s1526
    %v1528 = vmul.f32 %v1527, %v1520
    %v1529 = vmul.f32 %v1527, %v1521
    %v1530 = vadd.f32 %v1524, %v1528
    %v1531 = vadd.f32 %v1525, %v1529
    %1532 = vst.msk [vmem:[#allocation3] sm:$0xff] %vm157, %v1530
    %1533 = vst.msk [vmem:[#allocation3 + $0x8] sm:$0xff] %vm157, %v1531
    %v1534 = vld [vmem:[%s9] sm:$0xff]
    %v1535 = vld [vmem:[%s9 + $0x8] sm:$0xff]
    %v1536 = vld [vmem:[%s10] sm:$0x1]
    %v1538 = vlaneseq
    %v1539 = vshrl.u32 %v1538, 7
    %v1540 = vsub.s32 0, %v1539
    %v1541 = vrot.slane %v1536, %v1540
    %v1544 = vsel %vm157, %v1530, 0
    %v1547 = vsel %vm157, %v1531, 0
    %1549 = vmatprep.subr.mxu0 0.0
    %1550 = vmatpush1.msra.mxu0 %v1534
    %1551 = vmatprep.subr.mxu0 0.0
    %1552 = vmatpush1.msra.mxu0 %v1535
    %1553 = vmatprep.subr.mxu0 0.0
    %1554 = vmatpush1.msra.mxu0 0.0
    %1555 = vmatprep.subr.mxu0 0.0
    %1556 = vmatpush1.msra.mxu0 0.0
    %1557 = vmatprep.subr.mxu0 0.0
    %1558 = vmatpush1.msra.mxu0 0.0
    %1559 = vmatprep.subr.mxu0 0.0
    %1560 = vmatpush1.msra.mxu0 0.0
    %1561 = vmatprep.subr.mxu0 0.0
    %1562 = vmatpush1.msra.mxu0 0.0
    %1563 = vmatprep.subr.mxu0 0.0
    %1564 = vmatpush1.msra.mxu0 0.0
    %1565 = vmatprep.subr.mxu0 0.0
    %1566 = vmatpush1.msra.mxu0 0.0
    %1567 = vmatprep.subr.mxu0 0.0
    %1568 = vmatpush1.msra.mxu0 0.0
    %1569 = vmatprep.subr.mxu0 0.0
    %1570 = vmatpush1.msra.mxu0 0.0
    %1571 = vmatprep.subr.mxu0 0.0
    %1572 = vmatpush1.msra.mxu0 0.0
    %1573 = vmatprep.subr.mxu0 0.0
    %1574 = vmatpush1.msra.mxu0 0.0
    %1575 = vmatprep.subr.mxu0 0.0
    %1576 = vmatpush1.msra.mxu0 0.0
    %1577 = vmatprep.subr.mxu0 0.0
    %1578 = vmatpush1.msra.mxu0 0.0
    %1579 = vmatprep.subr.mxu0 0.0
    %1580 = vmatpush1.msra.mxu0 0.0
    %1581 = vmatprep.subr.mxu0 0.0
    %1582 = vmatpush1.msra.mxu0 0.0
    %1583 = vmatprep.subr.mxu0 0.0
    %1584 = vmatpush1.msra.mxu0 0.0
    %1585 = vmatprep.subr.mxu0 0.0
    %1586 = vmatpush1.msra.mxu0 0.0
    %1587 = vmatprep.subr.mxu0 0.0
    %1588 = vmatpush1.msra.mxu0 0.0
    %1589 = vmatprep.subr.mxu0 0.0
    %1590 = vmatpush1.msra.mxu0 0.0
    %1591 = vmatprep.subr.mxu0 0.0
    %1592 = vmatpush1.msra.mxu0 0.0
    %1593 = vmatprep.subr.mxu0 0.0
    %1594 = vmatpush1.msra.mxu0 0.0
    %1595 = vmatprep.subr.mxu0 0.0
    %1596 = vmatpush1.msra.mxu0 0.0
    %1597 = vmatprep.subr.mxu0 0.0
    %1598 = vmatpush1.msra.mxu0 0.0
    %1599 = vmatprep.subr.mxu0 0.0
    %1600 = vmatpush1.msra.mxu0 0.0
    %1601 = vmatprep.subr.mxu0 0.0
    %1602 = vmatpush1.msra.mxu0 0.0
    %1603 = vmatprep.subr.mxu0 0.0
    %1604 = vmatpush1.msra.mxu0 0.0
    %1605 = vmatprep.subr.mxu0 0.0
    %1606 = vmatpush1.msra.mxu0 0.0
    %1607 = vmatprep.subr.mxu0 0.0
    %1608 = vmatpush1.msra.mxu0 0.0
    %1609 = vmatprep.subr.mxu0 0.0
    %1610 = vmatpush1.msra.mxu0 0.0
    %1611 = vmatprep.subr.mxu0 0.0
    %1612 = vmatpush1.msra.mxu0 0.0
    %1613 = vmatprep.mubr.f32.mxu0 0.0
    %1614 = vmatmul.mubr.f32.gmra.mrb[0].mxu0 %v1544
    %v1615 = vpop.f32.mrb[0].mxu0
    %v1616 = vadd.f32 %v1541, %v1615
    %v1617 = vpop.f32.mrb[0].mxu0
    %1618 = vmatprep.mubr.f32.mxu0 0.0
    %1619 = vmatmul.mubr.f32.gmra.mrb[0].mxu0 %v1547
    %v1620 = vpop.f32.mrb[0].mxu0
    %v1621 = vadd.f32 %v1541, %v1620
    %v1622 = vpop.f32.mrb[0].mxu0
    %1623 = vdwg.mxu0
    %vm1624 = vcmask 31744
    %1625 = vst.msk [vmem:[%s12] sm:$0xff] %vm1624, %v1616
    %1626 = vst.msk [vmem:[%s12 + $0x8] sm:$0xff] %vm1624, %v1621
    // Predicated region
    $region46: #{gat_forward.1} parent=1 // pred_check
      _
    $region47: #{gat_forward.1} parent=1 // pred_check_branch
      %1628 = sbr.rel (0) target = $region49
    $region48: #{gat_forward.1} parent=1 // pred_region
      %s1630 = ssub.s32 256, 256
      %1631 = vsyncadd [#allocation4], %s1630
      %s1632 = sshll.u32 [#allocation3], 4
      %s1633 = int_to_ptr.vmem [resolvable:$true] %s1632
      %1638 = dma.vmem_to_hbm [thread:$0]  %s1633, 256, %s11, [#allocation4], 128, 128, 8
    $region49: #{gat_forward.1} parent=1 // pred_fallthru
      _
    // Predicated region
    $region50: #{gat_forward.1} parent=1 // pred_check
      _
    $region51: #{gat_forward.1} parent=1 // pred_check_branch
      %1640 = sbr.rel (0) target = $region53
    $region52: #{gat_forward.1} parent=1 // pred_region
      _
    $region53: #{gat_forward.1} parent=1 // pred_fallthru
      _
    // Predicated region
    $region54: #{gat_forward.1} parent=1 // pred_check
      _
    $region55: #{gat_forward.1} parent=1 // pred_check_branch
      %1642 = sbr.rel (0) target = $region57
    $region56: #{gat_forward.1} parent=1 // pred_region
      %1643 = dma.done [#allocation4], 256
    $region57: #{gat_forward.1} parent=1 // pred_fallthru
      _
    // Predicated region
    $region58: #{gat_forward.1} parent=1 // pred_check
      _
    $region59: #{gat_forward.1} parent=1 // pred_check_branch
      %1645 = sbr.rel (0) target = $region61
    $region60: #{gat_forward.1} parent=1 // pred_region
      _
    $region61: #{gat_forward.1} parent=1 // pred_fallthru
      _
    %1646 = vsyncpa [#allocation4], 1

</llo_original>
